<compile_context>
chip_gen: v5e
topology: v5e:2x2
jax: 0.10.0
libtpu: 0.0.40
codegen_flags: <defaults>
</compile_context>

<pallas_src>
import functools

import jax
import jax.numpy as jnp
from jax.experimental import pallas as pl
from jax.experimental.pallas import tpu as pltpu

X_DIM = 8          # X = [X12 (2), X34 (2), X58 (4)]
Z_DIM = 2          # latent dim; zero-padded to 4*Z_DIM = 8 inside forward


def _round_up(n, m):
    return ((n + m - 1) // m) * m


# ---------------------------------------------------------------------------
# Pure-JAX reference (original, unfolded, batch-major math) -- used only to
# check the kernel's output in __main__.
# ---------------------------------------------------------------------------
def realnvp_apply_ref(x, p):
    masks, ws1, bs1, ws2, bs2, wt1, bt1, wt2, bt2 = p
    n_layers = masks.shape[0]
    for l in range(n_layers):
        m = masks[l]
        xm = x * m
        hs = jnp.tanh(jnp.dot(xm, ws1[l], preferred_element_type=jnp.float32) + bs1[l])
        s = jnp.tanh(jnp.dot(hs, ws2[l], preferred_element_type=jnp.float32) + bs2[l]) * (1.0 - m)
        ht = jnp.tanh(jnp.dot(xm, wt1[l], preferred_element_type=jnp.float32) + bt1[l])
        t = (jnp.dot(ht, wt2[l], preferred_element_type=jnp.float32) + bt2[l]) * (1.0 - m)
        x = xm + (1.0 - m) * (x * jnp.exp(s) + t)
    return x


def invertible_forward_ref(x, z, params):
    p_alpha, p_a, p_b, p_c = params
    batch = x.shape[0]
    zd = z.shape[1]
    z_full = jnp.concatenate([z, jnp.zeros((batch, 3 * zd), x.dtype)], axis=-1)
    bias = realnvp_apply_ref(z_full, p_alpha)
    bias1, bias2 = bias[:, 0 * zd:1 * zd], bias[:, 1 * zd:2 * zd]
    bias3, bias4 = bias[:, 2 * zd:3 * zd], bias[:, 3 * zd:4 * zd]
    x12, x34, x58 = x[:, :2], x[:, 2:4], x[:, 4:8]
    a12 = x12 + bias1
    b12 = a12 + bias2
    b34 = realnvp_apply_ref(a12, p_a) + x34
    b14 = jnp.concatenate([b12, b34], axis=-1)
    c12 = b12 + bias3
    y12 = c12 + bias4
    y34 = realnvp_apply_ref(c12, p_c) + b34
    y58 = realnvp_apply_ref(b14, p_b) + x58
    return jnp.concatenate([y12, y34, y58], axis=-1)


# ---------------------------------------------------------------------------
# Parameter packing: fold masks, fuse s|t weights, transpose to (O, K) for
# feature-major MXU dots, pad & stack all modules' layers into 4 arrays.
#   w1_st : (L_total, 2*h_max, d_max)   rows [0:hp]=W1_s.T, [hp:2hp]=W1_t.T
#   b1_st : (L_total, 2*h_max, 1)
#   w2_bd : (L_total, 2*d_max, 2*h_max) block-diag [[W2_s.T, 0], [0, W2_t.T]]
#   b2_st : (L_total, 2*d_max, 1)
# ---------------------------------------------------------------------------
def _pad2(a, rows, cols):
    return jnp.pad(a, ((0, rows - a.shape[0]), (0, cols - a.shape[1])))


def pack_params(params, compute_dtype=jnp.float32):
    d_max = max(p[0].shape[2] for p in params)                    # masks: (L, 1, D)
    h_max = max(_round_up(p[1].shape[2], 8) for p in params)      # ws1:   (L, D, H)

    w1s, b1s, w2s, b2s = [], [], [], []
    meta = []
    off = 0
    for (masks, ws1, bs1, ws2, bs2, wt1, bt1, wt2, bt2) in params:
        n_layers, _, d = masks.shape
        h = ws1.shape[2]
        hp = _round_up(h, 8)
        meta.append((off, n_layers, d, hp))
        for l in range(n_layers):
            m = masks[l, 0]                     # (d,)
            keep = m[:, None]                   # zero W1 rows where m==0
            upd = (1.0 - m)[None, :]            # zero W2 cols / bias where m==1

            w1_s = _pad2((ws1[l] * keep).T, hp, d)       # (hp, d)
            w1_t = _pad2((wt1[l] * keep).T, hp, d)
            w1_st = jnp.concatenate([w1_s, w1_t], axis=0)                    # (2hp, d)
            b1_st = jnp.concatenate([_pad2(bs1[l].T, hp, 1),
                                     _pad2(bt1[l].T, hp, 1)], axis=0)        # (2hp, 1)

            w2_s = _pad2((ws2[l] * upd).T, d, hp)        # (d, hp)
            w2_t = _pad2((wt2[l] * upd).T, d, hp)
            zblk = jnp.zeros((d, hp), jnp.float32)
            w2_bd = jnp.concatenate(
                [jnp.concatenate([w2_s, zblk], axis=1),
                 jnp.concatenate([zblk, w2_t], axis=1)], axis=0)             # (2d, 2hp)
            b2_st = jnp.concatenate([(bs2[l] * upd).T, (bt2[l] * upd).T],
                                    axis=0)                                   # (2d, 1)

            w1s.append(_pad2(w1_st, 2 * h_max, d_max))
            b1s.append(_pad2(b1_st, 2 * h_max, 1))
            w2s.append(_pad2(w2_bd, 2 * d_max, 2 * h_max))
            b2s.append(_pad2(b2_st, 2 * d_max, 1))
        off += n_layers

    w1 = jnp.stack(w1s).astype(compute_dtype)      # weights in compute dtype (MXU inputs)
    b1 = jnp.stack(b1s).astype(jnp.float32)        # biases stay f32 (added to f32 acc)
    w2 = jnp.stack(w2s).astype(compute_dtype)
    b2 = jnp.stack(b2s).astype(jnp.float32)
    return (w1, b1, w2, b2), tuple(meta)


# ---------------------------------------------------------------------------
# Pallas kernel (feature-major: activations are (features, batch_lanes))
# ---------------------------------------------------------------------------
def _realnvp_folded(x, w1, b1, w2, b2, off, n_layers, d, hp):
    """Mask-folded, s/t-fused RealNVP forward on a (d, B) feature-major block."""
    cdt = w1.dtype
    for l in range(n_layers):                    # static unroll (tiny trip counts)
        i = off + l
        w1l = w1[i, :2 * hp, :d]                 # (2hp, d)
        b1l = b1[i, :2 * hp, :]                  # (2hp, 1)
        w2l = w2[i, :2 * d, :2 * hp]             # (2d, 2hp) block-diag
        b2l = b2[i, :2 * d, :]                   # (2d, 1)
        # One MXU dot + one tanh gives the stacked hidden [hs; ht].
        h = jnp.tanh(jnp.dot(w1l, x.astype(cdt),
                             preferred_element_type=jnp.float32) + b1l)
        # One MXU dot gives the stacked pre-activations [s_pre; t_pre].
        st = jnp.dot(w2l, h.astype(cdt),
                     preferred_element_type=jnp.float32) + b2l
        s = jnp.tanh(st[:d, :])                  # mask already folded (zero on kept)
        t = st[d:, :]
        x = x * jnp.exp(s) + t                   # exact folded coupling update
    return x


def _kernel(x_ref, z_ref, w1_ref, b1_ref, w2_ref, b2_ref, out_ref, *, meta):
    m_alpha, m_a, m_b, m_c = meta
    # Packed params are tiny (~hundreds of KB); load whole arrays once.
    w1 = w1_ref[...]
    b1 = b1_ref[...]
    w2 = w2_ref[...]
    b2 = b2_ref[...]

    def nvp(v, m):
        return _realnvp_folded(v, w1, b1, w2, b2, *m)

    x = x_ref[...]                               # (8, Bt)
    zf = z_ref[...]                              # (8, Bt), rows 2..7 already zero

    bias = nvp(zf, m_alpha)                      # (8, Bt)
    bias1, bias2 = bias[0:2, :], bias[2:4, :]
    bias3, bias4 = bias[4:6, :], bias[6:8, :]

    x12, x34, x58 = x[0:2, :], x[2:4, :], x[4:8, :]
    a12 = x12 + bias1
    b12 = a12 + bias2
    b34 = nvp(a12, m_a) + x34
    b14 = jnp.concatenate([b12, b34], axis=0)    # (4, Bt)
    c12 = b12 + bias3
    y12 = c12 + bias4
    y34 = nvp(c12, m_c) + b34
    y58 = nvp(b14, m_b) + x58

    # Single full-tile, lane-dense store.
    out_ref[...] = jnp.concatenate([y12, y34, y58], axis=0).astype(out_ref.dtype)


# ---------------------------------------------------------------------------
# Wrapper factory: packs params ONCE, returns a jitted forward(x, z).
# ---------------------------------------------------------------------------
def make_invertible_forward(params, *, batch_tile=512, compute_dtype=jnp.float32):
    assert batch_tile % 128 == 0, "batch_tile must be a multiple of 128 lanes"
    packed, meta = pack_params(params, compute_dtype)
    kernel = functools.partial(_kernel, meta=meta)

    def const_spec(a):
        # Full-array block, constant index_map -> stays VMEM-resident across steps.
        return pl.BlockSpec(a.shape, lambda i: (0, 0, 0))

    @jax.jit
    def forward(x, z):
        B = x.shape[0]
        # Lane tile: split the batch across >= 2 grid steps when possible so
        # both v7x TensorCores get work; cap at batch_tile lanes per step.
        lanes = max(128, min(batch_tile, _round_up(-(-B // 2), 128)))
        Bp = _round_up(B, lanes)

        # Feature-major, zero-padded slabs built with a single pad each.
        xt = jnp.pad(x.T.astype(jnp.float32), ((0, 0), (0, Bp - B)))
        zt = jnp.pad(z.T.astype(jnp.float32),
                     ((0, X_DIM - Z_DIM), (0, Bp - B)))   # Z_pad done here, not in kernel

        batch_spec = pl.BlockSpec((X_DIM, lanes), lambda i: (0, i))
        out = pl.pallas_call(
            kernel,
            out_shape=jax.ShapeDtypeStruct((X_DIM, Bp), jnp.float32),
            grid=(Bp // lanes,),
            in_specs=[batch_spec, batch_spec] + [const_spec(a) for a in packed],
            out_specs=batch_spec,
            compiler_params=pltpu.CompilerParams(
                dimension_semantics=("parallel",)),
        )(xt, zt, *packed)
        return out[:, :B].T

    return forward


# ---------------------------------------------------------------------------
# Deterministic parameter init (synthetic weights, shapes from __init__)
# ---------------------------------------------------------------------------
def init_realnvp(key, split_a, dim, hidden, layers, scale=0.1):
    base = jnp.array([1.0] * split_a + [0.0] * (dim - split_a), jnp.float32)
    masks = jnp.stack(
        [base if (l % 2 == 0) else 1.0 - base for l in range(layers)]
    ).reshape(layers, 1, dim)
    ks = jax.random.split(key, 8)
    ws1 = scale * jax.random.normal(ks[0], (layers, dim, hidden), jnp.float32)
    bs1 = scale * jax.random.normal(ks[1], (layers, 1, hidden), jnp.float32)
    ws2 = scale * jax.random.normal(ks[2], (layers, hidden, dim), jnp.float32)
    bs2 = scale * jax.random.normal(ks[3], (layers, 1, dim), jnp.float32)
    wt1 = scale * jax.random.normal(ks[4], (layers, dim, hidden), jnp.float32)
    bt1 = scale * jax.random.normal(ks[5], (layers, 1, hidden), jnp.float32)
    wt2 = scale * jax.random.normal(ks[6], (layers, hidden, dim), jnp.float32)
    bt2 = scale * jax.random.normal(ks[7], (layers, 1, dim), jnp.float32)
    return (masks, ws1, bs1, ws2, bs2, wt1, bt1, wt2, bt2)


if __name__ == "__main__":
    key = jax.random.PRNGKey(0)
    k_x, k_z, k_alpha, k_a, k_b, k_c = jax.random.split(key, 6)

    B = 16
    hidden_alpha, hidden_a, hidden_b, hidden_c = 32, 16, 24, 16

    # split_alpha = RealNVP(2, 8, hidden_alpha, layers=4) -> acts on 4*Z_dim = 8 features
    p_alpha = init_realnvp(k_alpha, 2, 4 * Z_DIM, hidden_alpha, layers=4)
    # a12_b34 = RealNVP(1, 1, hidden_a, layers=2)          -> 2 features
    p_a = init_realnvp(k_a, 1, 2, hidden_a, layers=2)
    # b14_y58 = RealNVP(2, 2, hidden_b, layers=2)           -> 4 features
    p_b = init_realnvp(k_b, 2, 4, hidden_b, layers=2)
    # c12_y34 = RealNVP(1, 1, hidden_c, layers=2)           -> 2 features
    p_c = init_realnvp(k_c, 1, 2, hidden_c, layers=2)
    params = (p_alpha, p_a, p_b, p_c)

    X = jax.random.normal(k_x, (B, X_DIM), jnp.float32)
    Z = jax.random.normal(k_z, (B, Z_DIM), jnp.float32)

    y_ref = invertible_forward_ref(X, Z, params)

    # f32 path (safe default on all generations, incl. v5e).
    # Tolerance accounts for MXU default-precision f32 matmuls (bf16 passes)
    # differing slightly between kernel and XLA reference.
    fwd_f32 = make_invertible_forward(params, batch_tile=512)
    y32 = jax.block_until_ready(fwd_f32(X, Z))
    assert y32.shape == (B, X_DIM)
    assert jnp.allclose(y32, y_ref, rtol=1e-2, atol=1e-2), "f32 kernel mismatch vs reference"

    # bf16 compute path (v6e/v7x: bf16 MXU inputs, f32 accumulate/update).
    fwd_bf16 = make_invertible_forward(params, batch_tile=512,
                                       compute_dtype=jnp.bfloat16)
    y16 = jax.block_until_ready(fwd_bf16(X, Z))
    assert y16.shape == (B, X_DIM)
    assert jnp.allclose(y16, y_ref, rtol=5e-2, atol=5e-2), "bf16 kernel mismatch vs reference"

    print("KERNEL_OK")
</pallas_src>

<mosaic_0001>
module attributes {stable_mosaic.version = 11 : i64} {
  func.func @_kernel(%arg0: i32, %arg1: memref<8x128xf32, #tpu.memory_space<vmem>>, %arg2: memref<8x128xf32, #tpu.memory_space<vmem>>, %arg3: memref<10x64x8xf32, #tpu.memory_space<vmem>>, %arg4: memref<10x64x1xf32, #tpu.memory_space<vmem>>, %arg5: memref<10x16x64xf32, #tpu.memory_space<vmem>>, %arg6: memref<10x16x1xf32, #tpu.memory_space<vmem>>, %arg7: memref<8x128xf32, #tpu.memory_space<vmem>>) attributes {dimension_semantics = [#tpu.dimension_semantics<parallel>], iteration_bounds = array<i64: 1>, scalar_prefetch = 0 : i64, scratch_operands = 0 : i64, tpu.core_type = #tpu.core_type<tc>, window_params = [{transform_indices = @transform_0, window_bounds = array<i64: 8, 128>}, {transform_indices = @transform_1, window_bounds = array<i64: 8, 128>}, {pipeline_mode = #tpu.pipeline_mode<synchronous>, transform_indices = @transform_2, window_bounds = array<i64: 10, 64, 8>}, {pipeline_mode = #tpu.pipeline_mode<synchronous>, transform_indices = @transform_3, window_bounds = array<i64: 10, 64, 1>}, {pipeline_mode = #tpu.pipeline_mode<synchronous>, transform_indices = @transform_4, window_bounds = array<i64: 10, 16, 64>}, {pipeline_mode = #tpu.pipeline_mode<synchronous>, transform_indices = @transform_5, window_bounds = array<i64: 10, 16, 1>}, {transform_indices = @transform_6, window_bounds = array<i64: 8, 128>}]} {
    %c0 = arith.constant 0 : index
    %c0_0 = arith.constant 0 : index
    %c0_1 = arith.constant 0 : index
    %0 = vector.load %arg3[%c0, %c0_0, %c0_1] : memref<10x64x8xf32, #tpu.memory_space<vmem>>, vector<10x64x8xf32>
    %c0_2 = arith.constant 0 : index
    %c0_3 = arith.constant 0 : index
    %c0_4 = arith.constant 0 : index
    %1 = vector.load %arg4[%c0_2, %c0_3, %c0_4] : memref<10x64x1xf32, #tpu.memory_space<vmem>>, vector<10x64x1xf32>
    %c0_5 = arith.constant 0 : index
    %c0_6 = arith.constant 0 : index
    %c0_7 = arith.constant 0 : index
    %2 = vector.load %arg5[%c0_5, %c0_6, %c0_7] : memref<10x16x64xf32, #tpu.memory_space<vmem>>, vector<10x16x64xf32>
    %c0_8 = arith.constant 0 : index
    %c0_9 = arith.constant 0 : index
    %c0_10 = arith.constant 0 : index
    %3 = vector.load %arg6[%c0_8, %c0_9, %c0_10] : memref<10x16x1xf32, #tpu.memory_space<vmem>>, vector<10x16x1xf32>
    %c0_11 = arith.constant 0 : index
    %c0_12 = arith.constant 0 : index
    %4 = vector.load %arg1[%c0_11, %c0_12] : memref<8x128xf32, #tpu.memory_space<vmem>>, vector<8x128xf32>
    %c0_13 = arith.constant 0 : index
    %c0_14 = arith.constant 0 : index
    %5 = vector.load %arg2[%c0_13, %c0_14] : memref<8x128xf32, #tpu.memory_space<vmem>>, vector<8x128xf32>
    %6 = vector.extract_strided_slice %0 {offsets = [0, 0, 0], sizes = [1, 64, 8], strides = [1, 1, 1]} : vector<10x64x8xf32> to vector<1x64x8xf32>
    %7 = vector.shape_cast %6 : vector<1x64x8xf32> to vector<64x8xf32>
    %8 = vector.extract_strided_slice %1 {offsets = [0, 0, 0], sizes = [1, 64, 1], strides = [1, 1, 1]} : vector<10x64x1xf32> to vector<1x64x1xf32>
    %9 = vector.shape_cast %8 : vector<1x64x1xf32> to vector<64x1xf32>
    %10 = vector.extract_strided_slice %2 {offsets = [0, 0, 0], sizes = [1, 16, 64], strides = [1, 1, 1]} : vector<10x16x64xf32> to vector<1x16x64xf32>
    %11 = vector.shape_cast %10 : vector<1x16x64xf32> to vector<16x64xf32>
    %12 = vector.extract_strided_slice %3 {offsets = [0, 0, 0], sizes = [1, 16, 1], strides = [1, 1, 1]} : vector<10x16x1xf32> to vector<1x16x1xf32>
    %13 = vector.shape_cast %12 : vector<1x16x1xf32> to vector<16x1xf32>
    %cst = arith.constant dense<0.000000e+00> : vector<64x128xf32>
    %14 = tpu.matmul %7, %5, %cst {dimension_numbers = #tpu.dot_dimension_numbers<[1], [0], [0], [1], [0, 0, 1, 1], [], []>} : vector<64x8xf32>, vector<8x128xf32>, vector<64x128xf32> -> vector<64x128xf32>
    %15 = vector.broadcast %9 : vector<64x1xf32> to vector<64x128xf32>
    %16 = arith.addf %14, %15 : vector<64x128xf32>
    %17 = math.tanh %16 : vector<64x128xf32>
    %cst_15 = arith.constant dense<0.000000e+00> : vector<16x128xf32>
    %18 = tpu.matmul %11, %17, %cst_15 {dimension_numbers = #tpu.dot_dimension_numbers<[1], [0], [0], [1], [0, 0, 1, 1], [], []>} : vector<16x64xf32>, vector<64x128xf32>, vector<16x128xf32> -> vector<16x128xf32>
    %19 = vector.broadcast %13 : vector<16x1xf32> to vector<16x128xf32>
    %20 = arith.addf %18, %19 : vector<16x128xf32>
    %21 = vector.extract_strided_slice %20 {offsets = [0, 0], sizes = [8, 128], strides = [1, 1]} : vector<16x128xf32> to vector<8x128xf32>
    %22 = math.tanh %21 : vector<8x128xf32>
    %23 = vector.extract_strided_slice %20 {offsets = [8, 0], sizes = [8, 128], strides = [1, 1]} : vector<16x128xf32> to vector<8x128xf32>
    %24 = math.exp %22 : vector<8x128xf32>
    %25 = arith.mulf %5, %24 : vector<8x128xf32>
    %26 = arith.addf %25, %23 : vector<8x128xf32>
    %27 = vector.extract_strided_slice %0 {offsets = [1, 0, 0], sizes = [1, 64, 8], strides = [1, 1, 1]} : vector<10x64x8xf32> to vector<1x64x8xf32>
    %28 = vector.shape_cast %27 : vector<1x64x8xf32> to vector<64x8xf32>
    %29 = vector.extract_strided_slice %1 {offsets = [1, 0, 0], sizes = [1, 64, 1], strides = [1, 1, 1]} : vector<10x64x1xf32> to vector<1x64x1xf32>
    %30 = vector.shape_cast %29 : vector<1x64x1xf32> to vector<64x1xf32>
    %31 = vector.extract_strided_slice %2 {offsets = [1, 0, 0], sizes = [1, 16, 64], strides = [1, 1, 1]} : vector<10x16x64xf32> to vector<1x16x64xf32>
    %32 = vector.shape_cast %31 : vector<1x16x64xf32> to vector<16x64xf32>
    %33 = vector.extract_strided_slice %3 {offsets = [1, 0, 0], sizes = [1, 16, 1], strides = [1, 1, 1]} : vector<10x16x1xf32> to vector<1x16x1xf32>
    %34 = vector.shape_cast %33 : vector<1x16x1xf32> to vector<16x1xf32>
    %cst_16 = arith.constant dense<0.000000e+00> : vector<64x128xf32>
    %35 = tpu.matmul %28, %26, %cst_16 {dimension_numbers = #tpu.dot_dimension_numbers<[1], [0], [0], [1], [0, 0, 1, 1], [], []>} : vector<64x8xf32>, vector<8x128xf32>, vector<64x128xf32> -> vector<64x128xf32>
    %36 = vector.broadcast %30 : vector<64x1xf32> to vector<64x128xf32>
    %37 = arith.addf %35, %36 : vector<64x128xf32>
    %38 = math.tanh %37 : vector<64x128xf32>
    %cst_17 = arith.constant dense<0.000000e+00> : vector<16x128xf32>
    %39 = tpu.matmul %32, %38, %cst_17 {dimension_numbers = #tpu.dot_dimension_numbers<[1], [0], [0], [1], [0, 0, 1, 1], [], []>} : vector<16x64xf32>, vector<64x128xf32>, vector<16x128xf32> -> vector<16x128xf32>
    %40 = vector.broadcast %34 : vector<16x1xf32> to vector<16x128xf32>
    %41 = arith.addf %39, %40 : vector<16x128xf32>
    %42 = vector.extract_strided_slice %41 {offsets = [0, 0], sizes = [8, 128], strides = [1, 1]} : vector<16x128xf32> to vector<8x128xf32>
    %43 = math.tanh %42 : vector<8x128xf32>
    %44 = vector.extract_strided_slice %41 {offsets = [8, 0], sizes = [8, 128], strides = [1, 1]} : vector<16x128xf32> to vector<8x128xf32>
    %45 = math.exp %43 : vector<8x128xf32>
    %46 = arith.mulf %26, %45 : vector<8x128xf32>
    %47 = arith.addf %46, %44 : vector<8x128xf32>
    %48 = vector.extract_strided_slice %0 {offsets = [2, 0, 0], sizes = [1, 64, 8], strides = [1, 1, 1]} : vector<10x64x8xf32> to vector<1x64x8xf32>
    %49 = vector.shape_cast %48 : vector<1x64x8xf32> to vector<64x8xf32>
    %50 = vector.extract_strided_slice %1 {offsets = [2, 0, 0], sizes = [1, 64, 1], strides = [1, 1, 1]} : vector<10x64x1xf32> to vector<1x64x1xf32>
    %51 = vector.shape_cast %50 : vector<1x64x1xf32> to vector<64x1xf32>
    %52 = vector.extract_strided_slice %2 {offsets = [2, 0, 0], sizes = [1, 16, 64], strides = [1, 1, 1]} : vector<10x16x64xf32> to vector<1x16x64xf32>
    %53 = vector.shape_cast %52 : vector<1x16x64xf32> to vector<16x64xf32>
    %54 = vector.extract_strided_slice %3 {offsets = [2, 0, 0], sizes = [1, 16, 1], strides = [1, 1, 1]} : vector<10x16x1xf32> to vector<1x16x1xf32>
    %55 = vector.shape_cast %54 : vector<1x16x1xf32> to vector<16x1xf32>
    %cst_18 = arith.constant dense<0.000000e+00> : vector<64x128xf32>
    %56 = tpu.matmul %49, %47, %cst_18 {dimension_numbers = #tpu.dot_dimension_numbers<[1], [0], [0], [1], [0, 0, 1, 1], [], []>} : vector<64x8xf32>, vector<8x128xf32>, vector<64x128xf32> -> vector<64x128xf32>
    %57 = vector.broadcast %51 : vector<64x1xf32> to vector<64x128xf32>
    %58 = arith.addf %56, %57 : vector<64x128xf32>
    %59 = math.tanh %58 : vector<64x128xf32>
    %cst_19 = arith.constant dense<0.000000e+00> : vector<16x128xf32>
    %60 = tpu.matmul %53, %59, %cst_19 {dimension_numbers = #tpu.dot_dimension_numbers<[1], [0], [0], [1], [0, 0, 1, 1], [], []>} : vector<16x64xf32>, vector<64x128xf32>, vector<16x128xf32> -> vector<16x128xf32>
    %61 = vector.broadcast %55 : vector<16x1xf32> to vector<16x128xf32>
    %62 = arith.addf %60, %61 : vector<16x128xf32>
    %63 = vector.extract_strided_slice %62 {offsets = [0, 0], sizes = [8, 128], strides = [1, 1]} : vector<16x128xf32> to vector<8x128xf32>
    %64 = math.tanh %63 : vector<8x128xf32>
    %65 = vector.extract_strided_slice %62 {offsets = [8, 0], sizes = [8, 128], strides = [1, 1]} : vector<16x128xf32> to vector<8x128xf32>
    %66 = math.exp %64 : vector<8x128xf32>
    %67 = arith.mulf %47, %66 : vector<8x128xf32>
    %68 = arith.addf %67, %65 : vector<8x128xf32>
    %69 = vector.extract_strided_slice %0 {offsets = [3, 0, 0], sizes = [1, 64, 8], strides = [1, 1, 1]} : vector<10x64x8xf32> to vector<1x64x8xf32>
    %70 = vector.shape_cast %69 : vector<1x64x8xf32> to vector<64x8xf32>
    %71 = vector.extract_strided_slice %1 {offsets = [3, 0, 0], sizes = [1, 64, 1], strides = [1, 1, 1]} : vector<10x64x1xf32> to vector<1x64x1xf32>
    %72 = vector.shape_cast %71 : vector<1x64x1xf32> to vector<64x1xf32>
    %73 = vector.extract_strided_slice %2 {offsets = [3, 0, 0], sizes = [1, 16, 64], strides = [1, 1, 1]} : vector<10x16x64xf32> to vector<1x16x64xf32>
    %74 = vector.shape_cast %73 : vector<1x16x64xf32> to vector<16x64xf32>
    %75 = vector.extract_strided_slice %3 {offsets = [3, 0, 0], sizes = [1, 16, 1], strides = [1, 1, 1]} : vector<10x16x1xf32> to vector<1x16x1xf32>
    %76 = vector.shape_cast %75 : vector<1x16x1xf32> to vector<16x1xf32>
    %cst_20 = arith.constant dense<0.000000e+00> : vector<64x128xf32>
    %77 = tpu.matmul %70, %68, %cst_20 {dimension_numbers = #tpu.dot_dimension_numbers<[1], [0], [0], [1], [0, 0, 1, 1], [], []>} : vector<64x8xf32>, vector<8x128xf32>, vector<64x128xf32> -> vector<64x128xf32>
    %78 = vector.broadcast %72 : vector<64x1xf32> to vector<64x128xf32>
    %79 = arith.addf %77, %78 : vector<64x128xf32>
    %80 = math.tanh %79 : vector<64x128xf32>
    %cst_21 = arith.constant dense<0.000000e+00> : vector<16x128xf32>
    %81 = tpu.matmul %74, %80, %cst_21 {dimension_numbers = #tpu.dot_dimension_numbers<[1], [0], [0], [1], [0, 0, 1, 1], [], []>} : vector<16x64xf32>, vector<64x128xf32>, vector<16x128xf32> -> vector<16x128xf32>
    %82 = vector.broadcast %76 : vector<16x1xf32> to vector<16x128xf32>
    %83 = arith.addf %81, %82 : vector<16x128xf32>
    %84 = vector.extract_strided_slice %83 {offsets = [0, 0], sizes = [8, 128], strides = [1, 1]} : vector<16x128xf32> to vector<8x128xf32>
    %85 = math.tanh %84 : vector<8x128xf32>
    %86 = vector.extract_strided_slice %83 {offsets = [8, 0], sizes = [8, 128], strides = [1, 1]} : vector<16x128xf32> to vector<8x128xf32>
    %87 = math.exp %85 : vector<8x128xf32>
    %88 = arith.mulf %68, %87 : vector<8x128xf32>
    %89 = arith.addf %88, %86 : vector<8x128xf32>
    %90 = vector.extract_strided_slice %89 {offsets = [0, 0], sizes = [2, 128], strides = [1, 1]} : vector<8x128xf32> to vector<2x128xf32>
    %91 = vector.extract_strided_slice %89 {offsets = [2, 0], sizes = [2, 128], strides = [1, 1]} : vector<8x128xf32> to vector<2x128xf32>
    %92 = vector.extract_strided_slice %89 {offsets = [4, 0], sizes = [2, 128], strides = [1, 1]} : vector<8x128xf32> to vector<2x128xf32>
    %93 = vector.extract_strided_slice %89 {offsets = [6, 0], sizes = [2, 128], strides = [1, 1]} : vector<8x128xf32> to vector<2x128xf32>
    %94 = vector.extract_strided_slice %4 {offsets = [0, 0], sizes = [2, 128], strides = [1, 1]} : vector<8x128xf32> to vector<2x128xf32>
    %95 = vector.extract_strided_slice %4 {offsets = [2, 0], sizes = [2, 128], strides = [1, 1]} : vector<8x128xf32> to vector<2x128xf32>
    %96 = vector.extract_strided_slice %4 {offsets = [4, 0], sizes = [4, 128], strides = [1, 1]} : vector<8x128xf32> to vector<4x128xf32>
    %97 = arith.addf %94, %90 : vector<2x128xf32>
    %98 = arith.addf %97, %91 : vector<2x128xf32>
    %99 = vector.extract_strided_slice %0 {offsets = [4, 0, 0], sizes = [1, 32, 2], strides = [1, 1, 1]} : vector<10x64x8xf32> to vector<1x32x2xf32>
    %100 = vector.shape_cast %99 : vector<1x32x2xf32> to vector<32x2xf32>
    %101 = vector.extract_strided_slice %1 {offsets = [4, 0, 0], sizes = [1, 32, 1], strides = [1, 1, 1]} : vector<10x64x1xf32> to vector<1x32x1xf32>
    %102 = vector.shape_cast %101 : vector<1x32x1xf32> to vector<32x1xf32>
    %103 = vector.extract_strided_slice %2 {offsets = [4, 0, 0], sizes = [1, 4, 32], strides = [1, 1, 1]} : vector<10x16x64xf32> to vector<1x4x32xf32>
    %104 = vector.shape_cast %103 : vector<1x4x32xf32> to vector<4x32xf32>
    %105 = vector.extract_strided_slice %3 {offsets = [4, 0, 0], sizes = [1, 4, 1], strides = [1, 1, 1]} : vector<10x16x1xf32> to vector<1x4x1xf32>
    %106 = vector.shape_cast %105 : vector<1x4x1xf32> to vector<4x1xf32>
    %cst_22 = arith.constant dense<0.000000e+00> : vector<32x128xf32>
    %107 = tpu.matmul %100, %97, %cst_22 {dimension_numbers = #tpu.dot_dimension_numbers<[1], [0], [0], [1], [0, 0, 1, 1], [], []>} : vector<32x2xf32>, vector<2x128xf32>, vector<32x128xf32> -> vector<32x128xf32>
    %108 = vector.broadcast %102 : vector<32x1xf32> to vector<32x128xf32>
    %109 = arith.addf %107, %108 : vector<32x128xf32>
    %110 = math.tanh %109 : vector<32x128xf32>
    %cst_23 = arith.constant dense<0.000000e+00> : vector<4x128xf32>
    %111 = tpu.matmul %104, %110, %cst_23 {dimension_numbers = #tpu.dot_dimension_numbers<[1], [0], [0], [1], [0, 0, 1, 1], [], []>} : vector<4x32xf32>, vector<32x128xf32>, vector<4x128xf32> -> vector<4x128xf32>
    %112 = vector.broadcast %106 : vector<4x1xf32> to vector<4x128xf32>
    %113 = arith.addf %111, %112 : vector<4x128xf32>
    %114 = vector.extract_strided_slice %113 {offsets = [0, 0], sizes = [2, 128], strides = [1, 1]} : vector<4x128xf32> to vector<2x128xf32>
    %115 = math.tanh %114 : vector<2x128xf32>
    %116 = vector.extract_strided_slice %113 {offsets = [2, 0], sizes = [2, 128], strides = [1, 1]} : vector<4x128xf32> to vector<2x128xf32>
    %117 = math.exp %115 : vector<2x128xf32>
    %118 = arith.mulf %97, %117 : vector<2x128xf32>
    %119 = arith.addf %118, %116 : vector<2x128xf32>
    %120 = vector.extract_strided_slice %0 {offsets = [5, 0, 0], sizes = [1, 32, 2], strides = [1, 1, 1]} : vector<10x64x8xf32> to vector<1x32x2xf32>
    %121 = vector.shape_cast %120 : vector<1x32x2xf32> to vector<32x2xf32>
    %122 = vector.extract_strided_slice %1 {offsets = [5, 0, 0], sizes = [1, 32, 1], strides = [1, 1, 1]} : vector<10x64x1xf32> to vector<1x32x1xf32>
    %123 = vector.shape_cast %122 : vector<1x32x1xf32> to vector<32x1xf32>
    %124 = vector.extract_strided_slice %2 {offsets = [5, 0, 0], sizes = [1, 4, 32], strides = [1, 1, 1]} : vector<10x16x64xf32> to vector<1x4x32xf32>
    %125 = vector.shape_cast %124 : vector<1x4x32xf32> to vector<4x32xf32>
    %126 = vector.extract_strided_slice %3 {offsets = [5, 0, 0], sizes = [1, 4, 1], strides = [1, 1, 1]} : vector<10x16x1xf32> to vector<1x4x1xf32>
    %127 = vector.shape_cast %126 : vector<1x4x1xf32> to vector<4x1xf32>
    %cst_24 = arith.constant dense<0.000000e+00> : vector<32x128xf32>
    %128 = tpu.matmul %121, %119, %cst_24 {dimension_numbers = #tpu.dot_dimension_numbers<[1], [0], [0], [1], [0, 0, 1, 1], [], []>} : vector<32x2xf32>, vector<2x128xf32>, vector<32x128xf32> -> vector<32x128xf32>
    %129 = vector.broadcast %123 : vector<32x1xf32> to vector<32x128xf32>
    %130 = arith.addf %128, %129 : vector<32x128xf32>
    %131 = math.tanh %130 : vector<32x128xf32>
    %cst_25 = arith.constant dense<0.000000e+00> : vector<4x128xf32>
    %132 = tpu.matmul %125, %131, %cst_25 {dimension_numbers = #tpu.dot_dimension_numbers<[1], [0], [0], [1], [0, 0, 1, 1], [], []>} : vector<4x32xf32>, vector<32x128xf32>, vector<4x128xf32> -> vector<4x128xf32>
    %133 = vector.broadcast %127 : vector<4x1xf32> to vector<4x128xf32>
    %134 = arith.addf %132, %133 : vector<4x128xf32>
    %135 = vector.extract_strided_slice %134 {offsets = [0, 0], sizes = [2, 128], strides = [1, 1]} : vector<4x128xf32> to vector<2x128xf32>
    %136 = math.tanh %135 : vector<2x128xf32>
    %137 = vector.extract_strided_slice %134 {offsets = [2, 0], sizes = [2, 128], strides = [1, 1]} : vector<4x128xf32> to vector<2x128xf32>
    %138 = math.exp %136 : vector<2x128xf32>
    %139 = arith.mulf %119, %138 : vector<2x128xf32>
    %140 = arith.addf %139, %137 : vector<2x128xf32>
    %141 = arith.addf %140, %95 : vector<2x128xf32>
    %142 = tpu.concatenate %98, %141 in 0 : vector<2x128xf32>, vector<2x128xf32> -> vector<4x128xf32>
    %143 = arith.addf %98, %92 : vector<2x128xf32>
    %144 = arith.addf %143, %93 : vector<2x128xf32>
    %145 = vector.extract_strided_slice %0 {offsets = [8, 0, 0], sizes = [1, 32, 2], strides = [1, 1, 1]} : vector<10x64x8xf32> to vector<1x32x2xf32>
    %146 = vector.shape_cast %145 : vector<1x32x2xf32> to vector<32x2xf32>
    %147 = vector.extract_strided_slice %1 {offsets = [8, 0, 0], sizes = [1, 32, 1], strides = [1, 1, 1]} : vector<10x64x1xf32> to vector<1x32x1xf32>
    %148 = vector.shape_cast %147 : vector<1x32x1xf32> to vector<32x1xf32>
    %149 = vector.extract_strided_slice %2 {offsets = [8, 0, 0], sizes = [1, 4, 32], strides = [1, 1, 1]} : vector<10x16x64xf32> to vector<1x4x32xf32>
    %150 = vector.shape_cast %149 : vector<1x4x32xf32> to vector<4x32xf32>
    %151 = vector.extract_strided_slice %3 {offsets = [8, 0, 0], sizes = [1, 4, 1], strides = [1, 1, 1]} : vector<10x16x1xf32> to vector<1x4x1xf32>
    %152 = vector.shape_cast %151 : vector<1x4x1xf32> to vector<4x1xf32>
    %cst_26 = arith.constant dense<0.000000e+00> : vector<32x128xf32>
    %153 = tpu.matmul %146, %143, %cst_26 {dimension_numbers = #tpu.dot_dimension_numbers<[1], [0], [0], [1], [0, 0, 1, 1], [], []>} : vector<32x2xf32>, vector<2x128xf32>, vector<32x128xf32> -> vector<32x128xf32>
    %154 = vector.broadcast %148 : vector<32x1xf32> to vector<32x128xf32>
    %155 = arith.addf %153, %154 : vector<32x128xf32>
    %156 = math.tanh %155 : vector<32x128xf32>
    %cst_27 = arith.constant dense<0.000000e+00> : vector<4x128xf32>
    %157 = tpu.matmul %150, %156, %cst_27 {dimension_numbers = #tpu.dot_dimension_numbers<[1], [0], [0], [1], [0, 0, 1, 1], [], []>} : vector<4x32xf32>, vector<32x128xf32>, vector<4x128xf32> -> vector<4x128xf32>
    %158 = vector.broadcast %152 : vector<4x1xf32> to vector<4x128xf32>
    %159 = arith.addf %157, %158 : vector<4x128xf32>
    %160 = vector.extract_strided_slice %159 {offsets = [0, 0], sizes = [2, 128], strides = [1, 1]} : vector<4x128xf32> to vector<2x128xf32>
    %161 = math.tanh %160 : vector<2x128xf32>
    %162 = vector.extract_strided_slice %159 {offsets = [2, 0], sizes = [2, 128], strides = [1, 1]} : vector<4x128xf32> to vector<2x128xf32>
    %163 = math.exp %161 : vector<2x128xf32>
    %164 = arith.mulf %143, %163 : vector<2x128xf32>
    %165 = arith.addf %164, %162 : vector<2x128xf32>
    %166 = vector.extract_strided_slice %0 {offsets = [9, 0, 0], sizes = [1, 32, 2], strides = [1, 1, 1]} : vector<10x64x8xf32> to vector<1x32x2xf32>
    %167 = vector.shape_cast %166 : vector<1x32x2xf32> to vector<32x2xf32>
    %168 = vector.extract_strided_slice %1 {offsets = [9, 0, 0], sizes = [1, 32, 1], strides = [1, 1, 1]} : vector<10x64x1xf32> to vector<1x32x1xf32>
    %169 = vector.shape_cast %168 : vector<1x32x1xf32> to vector<32x1xf32>
    %170 = vector.extract_strided_slice %2 {offsets = [9, 0, 0], sizes = [1, 4, 32], strides = [1, 1, 1]} : vector<10x16x64xf32> to vector<1x4x32xf32>
    %171 = vector.shape_cast %170 : vector<1x4x32xf32> to vector<4x32xf32>
    %172 = vector.extract_strided_slice %3 {offsets = [9, 0, 0], sizes = [1, 4, 1], strides = [1, 1, 1]} : vector<10x16x1xf32> to vector<1x4x1xf32>
    %173 = vector.shape_cast %172 : vector<1x4x1xf32> to vector<4x1xf32>
    %cst_28 = arith.constant dense<0.000000e+00> : vector<32x128xf32>
    %174 = tpu.matmul %167, %165, %cst_28 {dimension_numbers = #tpu.dot_dimension_numbers<[1], [0], [0], [1], [0, 0, 1, 1], [], []>} : vector<32x2xf32>, vector<2x128xf32>, vector<32x128xf32> -> vector<32x128xf32>
    %175 = vector.broadcast %169 : vector<32x1xf32> to vector<32x128xf32>
    %176 = arith.addf %174, %175 : vector<32x128xf32>
    %177 = math.tanh %176 : vector<32x128xf32>
    %cst_29 = arith.constant dense<0.000000e+00> : vector<4x128xf32>
    %178 = tpu.matmul %171, %177, %cst_29 {dimension_numbers = #tpu.dot_dimension_numbers<[1], [0], [0], [1], [0, 0, 1, 1], [], []>} : vector<4x32xf32>, vector<32x128xf32>, vector<4x128xf32> -> vector<4x128xf32>
    %179 = vector.broadcast %173 : vector<4x1xf32> to vector<4x128xf32>
    %180 = arith.addf %178, %179 : vector<4x128xf32>
    %181 = vector.extract_strided_slice %180 {offsets = [0, 0], sizes = [2, 128], strides = [1, 1]} : vector<4x128xf32> to vector<2x128xf32>
    %182 = math.tanh %181 : vector<2x128xf32>
    %183 = vector.extract_strided_slice %180 {offsets = [2, 0], sizes = [2, 128], strides = [1, 1]} : vector<4x128xf32> to vector<2x128xf32>
    %184 = math.exp %182 : vector<2x128xf32>
    %185 = arith.mulf %165, %184 : vector<2x128xf32>
    %186 = arith.addf %185, %183 : vector<2x128xf32>
    %187 = arith.addf %186, %141 : vector<2x128xf32>
    %188 = vector.extract_strided_slice %0 {offsets = [6, 0, 0], sizes = [1, 48, 4], strides = [1, 1, 1]} : vector<10x64x8xf32> to vector<1x48x4xf32>
    %189 = vector.shape_cast %188 : vector<1x48x4xf32> to vector<48x4xf32>
    %190 = vector.extract_strided_slice %1 {offsets = [6, 0, 0], sizes = [1, 48, 1], strides = [1, 1, 1]} : vector<10x64x1xf32> to vector<1x48x1xf32>
    %191 = vector.shape_cast %190 : vector<1x48x1xf32> to vector<48x1xf32>
    %192 = vector.extract_strided_slice %2 {offsets = [6, 0, 0], sizes = [1, 8, 48], strides = [1, 1, 1]} : vector<10x16x64xf32> to vector<1x8x48xf32>
    %193 = vector.shape_cast %192 : vector<1x8x48xf32> to vector<8x48xf32>
    %194 = vector.extract_strided_slice %3 {offsets = [6, 0, 0], sizes = [1, 8, 1], strides = [1, 1, 1]} : vector<10x16x1xf32> to vector<1x8x1xf32>
    %195 = vector.shape_cast %194 : vector<1x8x1xf32> to vector<8x1xf32>
    %cst_30 = arith.constant dense<0.000000e+00> : vector<48x128xf32>
    %196 = tpu.matmul %189, %142, %cst_30 {dimension_numbers = #tpu.dot_dimension_numbers<[1], [0], [0], [1], [0, 0, 1, 1], [], []>} : vector<48x4xf32>, vector<4x128xf32>, vector<48x128xf32> -> vector<48x128xf32>
    %197 = vector.broadcast %191 : vector<48x1xf32> to vector<48x128xf32>
    %198 = arith.addf %196, %197 : vector<48x128xf32>
    %199 = math.tanh %198 : vector<48x128xf32>
    %cst_31 = arith.constant dense<0.000000e+00> : vector<8x128xf32>
    %200 = tpu.matmul %193, %199, %cst_31 {dimension_numbers = #tpu.dot_dimension_numbers<[1], [0], [0], [1], [0, 0, 1, 1], [], []>} : vector<8x48xf32>, vector<48x128xf32>, vector<8x128xf32> -> vector<8x128xf32>
    %201 = vector.broadcast %195 : vector<8x1xf32> to vector<8x128xf32>
    %202 = arith.addf %200, %201 : vector<8x128xf32>
    %203 = vector.extract_strided_slice %202 {offsets = [0, 0], sizes = [4, 128], strides = [1, 1]} : vector<8x128xf32> to vector<4x128xf32>
    %204 = math.tanh %203 : vector<4x128xf32>
    %205 = vector.extract_strided_slice %202 {offsets = [4, 0], sizes = [4, 128], strides = [1, 1]} : vector<8x128xf32> to vector<4x128xf32>
    %206 = math.exp %204 : vector<4x128xf32>
    %207 = arith.mulf %142, %206 : vector<4x128xf32>
    %208 = arith.addf %207, %205 : vector<4x128xf32>
    %209 = vector.extract_strided_slice %0 {offsets = [7, 0, 0], sizes = [1, 48, 4], strides = [1, 1, 1]} : vector<10x64x8xf32> to vector<1x48x4xf32>
    %210 = vector.shape_cast %209 : vector<1x48x4xf32> to vector<48x4xf32>
    %211 = vector.extract_strided_slice %1 {offsets = [7, 0, 0], sizes = [1, 48, 1], strides = [1, 1, 1]} : vector<10x64x1xf32> to vector<1x48x1xf32>
    %212 = vector.shape_cast %211 : vector<1x48x1xf32> to vector<48x1xf32>
    %213 = vector.extract_strided_slice %2 {offsets = [7, 0, 0], sizes = [1, 8, 48], strides = [1, 1, 1]} : vector<10x16x64xf32> to vector<1x8x48xf32>
    %214 = vector.shape_cast %213 : vector<1x8x48xf32> to vector<8x48xf32>
    %215 = vector.extract_strided_slice %3 {offsets = [7, 0, 0], sizes = [1, 8, 1], strides = [1, 1, 1]} : vector<10x16x1xf32> to vector<1x8x1xf32>
    %216 = vector.shape_cast %215 : vector<1x8x1xf32> to vector<8x1xf32>
    %cst_32 = arith.constant dense<0.000000e+00> : vector<48x128xf32>
    %217 = tpu.matmul %210, %208, %cst_32 {dimension_numbers = #tpu.dot_dimension_numbers<[1], [0], [0], [1], [0, 0, 1, 1], [], []>} : vector<48x4xf32>, vector<4x128xf32>, vector<48x128xf32> -> vector<48x128xf32>
    %218 = vector.broadcast %212 : vector<48x1xf32> to vector<48x128xf32>
    %219 = arith.addf %217, %218 : vector<48x128xf32>
    %220 = math.tanh %219 : vector<48x128xf32>
    %cst_33 = arith.constant dense<0.000000e+00> : vector<8x128xf32>
    %221 = tpu.matmul %214, %220, %cst_33 {dimension_numbers = #tpu.dot_dimension_numbers<[1], [0], [0], [1], [0, 0, 1, 1], [], []>} : vector<8x48xf32>, vector<48x128xf32>, vector<8x128xf32> -> vector<8x128xf32>
    %222 = vector.broadcast %216 : vector<8x1xf32> to vector<8x128xf32>
    %223 = arith.addf %221, %222 : vector<8x128xf32>
    %224 = vector.extract_strided_slice %223 {offsets = [0, 0], sizes = [4, 128], strides = [1, 1]} : vector<8x128xf32> to vector<4x128xf32>
    %225 = math.tanh %224 : vector<4x128xf32>
    %226 = vector.extract_strided_slice %223 {offsets = [4, 0], sizes = [4, 128], strides = [1, 1]} : vector<8x128xf32> to vector<4x128xf32>
    %227 = math.exp %225 : vector<4x128xf32>
    %228 = arith.mulf %208, %227 : vector<4x128xf32>
    %229 = arith.addf %228, %226 : vector<4x128xf32>
    %230 = arith.addf %229, %96 : vector<4x128xf32>
    %231 = tpu.concatenate %144, %187, %230 in 0 : vector<2x128xf32>, vector<2x128xf32>, vector<4x128xf32> -> vector<8x128xf32>
    %c0_34 = arith.constant 0 : index
    %c0_35 = arith.constant 0 : index
    %232 = vector.load %arg7[%c0_34, %c0_35] : memref<8x128xf32, #tpu.memory_space<vmem>>, vector<8x128xf32>
    tpu.vector_store %arg7[%c0_34, %c0_35], %231 {strides = array<i32>} : memref<8x128xf32, #tpu.memory_space<vmem>>, vector<8x128xf32>,
    return
  }
  func.func @transform_0(%arg0: i32) -> (i32, i32) {
    %c0_i32 = arith.constant 0 : i32
    %c0_i32_0 = arith.constant 0 : i32
    return %c0_i32, %arg0 : i32, i32
  }
  func.func @transform_1(%arg0: i32) -> (i32, i32) {
    %c0_i32 = arith.constant 0 : i32
    %c0_i32_0 = arith.constant 0 : i32
    return %c0_i32, %arg0 : i32, i32
  }
  func.func @transform_2(%arg0: i32) -> (i32, i32, i32) {
    %c0_i32 = arith.constant 0 : i32
    %c0_i32_0 = arith.constant 0 : i32
    %c0_i32_1 = arith.constant 0 : i32
    %c0_i32_2 = arith.constant 0 : i32
    return %c0_i32, %c0_i32_0, %c0_i32_1 : i32, i32, i32
  }
  func.func @transform_3(%arg0: i32) -> (i32, i32, i32) {
    %c0_i32 = arith.constant 0 : i32
    %c0_i32_0 = arith.constant 0 : i32
    %c0_i32_1 = arith.constant 0 : i32
    %c0_i32_2 = arith.constant 0 : i32
    return %c0_i32, %c0_i32_0, %c0_i32_1 : i32, i32, i32
  }
  func.func @transform_4(%arg0: i32) -> (i32, i32, i32) {
    %c0_i32 = arith.constant 0 : i32
    %c0_i32_0 = arith.constant 0 : i32
    %c0_i32_1 = arith.constant 0 : i32
    %c0_i32_2 = arith.constant 0 : i32
    return %c0_i32, %c0_i32_0, %c0_i32_1 : i32, i32, i32
  }
  func.func @transform_5(%arg0: i32) -> (i32, i32, i32) {
    %c0_i32 = arith.constant 0 : i32
    %c0_i32_0 = arith.constant 0 : i32
    %c0_i32_1 = arith.constant 0 : i32
    %c0_i32_2 = arith.constant 0 : i32
    return %c0_i32, %c0_i32_0, %c0_i32_1 : i32, i32, i32
  }
  func.func @transform_6(%arg0: i32) -> (i32, i32) {
    %c0_i32 = arith.constant 0 : i32
    %c0_i32_0 = arith.constant 0 : i32
    return %c0_i32, %arg0 : i32, i32
  }
}

</mosaic_0001>

<llo_original>
// kernel: forward.1
$region0: #{forward.1}
  #allocation0 [shape = 'u32[]', space=smem, size = 0x4, offset = 0x4, fixed_abs, tag = 'smem constant byte address 0x4 - core index']
  #allocation1 [shape = 'u32[72,128]{1,0:T(1,128)}', space=vmem, size = 0x9000, scoped, tag = 'internal scratch']
  %s0 = inlined_call_operand.vmem [shape: f32[8,128], index: 0, kind: input, shape index: {}]
  %s1 = inlined_call_operand.vmem [shape: f32[8,128], index: 1, kind: input, shape index: {}]
  %s2 = inlined_call_operand.hbm [shape: f32[10,64,8], index: 2, kind: input, shape index: {}]
  %s3 = inlined_call_operand.hbm [shape: f32[10,64,1], index: 3, kind: input, shape index: {}]
  %s4 = inlined_call_operand.hbm [shape: f32[10,16,64], index: 4, kind: input, shape index: {}]
  %s5 = inlined_call_operand.hbm [shape: f32[10,16,1], index: 5, kind: input, shape index: {}]
  %s6 = inlined_call_operand.vmem [shape: f32[8,128], index: 6, kind: output, shape index: {}]
  %s7 = sld [smem:[#allocation0]]
  $region50: #{forward.1} parent=0
    _
  %s9 = ssub.s32 1, %s7
  %s10 = scalar_select 0, %s9, %s7
  $region1: #{forward.1} parent=0
    #allocation2 [shape = 'u8[327680]{0}', space=vmem, size = 0x50000, scoped, tag = 'input window, operand 2, single buffered']
    #allocation3 [shape = 's32[1]{0}', space=sflag, size = 0x4, scoped, tag = 'scoped memory for forward.1']
    #allocation4 [shape = 'u8[327680]{0}', space=vmem, size = 0x50000, scoped, tag = 'input window, operand 3, single buffered']
    #allocation5 [shape = 's32[1]{0}', space=sflag, size = 0x4, scoped, tag = 'scoped memory for forward.1']
    #allocation6 [shape = 'u8[81920]{0}', space=vmem, size = 0x14000, scoped, tag = 'input window, operand 4, single buffered']
    #allocation7 [shape = 'u8[81920]{0}', space=vmem, size = 0x14000, scoped, tag = 'input window, operand 5, single buffered']
    #allocation8 [shape = 's32[1]{0}', space=sflag, size = 0x4, scoped, tag = 'scoped memory for forward.1']
    %11 = vsyncpa [#allocation3], 0
    %12 = vsyncpa [#allocation5], 0
    %13 = vsyncpa [#allocation8], 0
    // Predicated region
    $region2: #{forward.1} parent=1 // pred_check
      _
    $region3: #{forward.1} parent=1 // pred_check_branch
      %15 = sbr.rel (0) target = $region5
    $region4: #{forward.1} parent=1 // pred_region
      _
    $region5: #{forward.1} parent=1 // pred_fallthru
      _
    // Predicated region
    $region6: #{forward.1} parent=1 // pred_check
      _
    $region7: #{forward.1} parent=1 // pred_check_branch
      %17 = sbr.rel (0) target = $region9
    $region8: #{forward.1} parent=1 // pred_region
      _
    $region9: #{forward.1} parent=1 // pred_fallthru
      _
    // Predicated region
    $region10: #{forward.1} parent=1 // pred_check
      _
    $region11: #{forward.1} parent=1 // pred_check_branch
      %19 = sbr.rel (0) target = $region13
    $region12: #{forward.1} parent=1 // pred_region
      %21 = vsyncadd [#allocation3], 0
      %s22 = sshll.u32 %s2, 4
      %s23 = int_to_ptr.hbm [resolvable:$true] %s22
      %s24 = sshll.u32 [#allocation2], 4
      %s25 = int_to_ptr.vmem [resolvable:$true] %s24
      %30 = dma.hbm_to_vmem [thread:$0]  %s23, 10240, %s25, [#allocation3], 128, 128, 8
    $region13: #{forward.1} parent=1 // pred_fallthru
      _
    // Predicated region
    $region14: #{forward.1} parent=1 // pred_check
      _
    $region15: #{forward.1} parent=1 // pred_check_branch
      %32 = sbr.rel (0) target = $region17
    $region16: #{forward.1} parent=1 // pred_region
      %34 = vsyncadd [#allocation5], 0
      %s35 = sshll.u32 %s3, 4
      %s36 = int_to_ptr.hbm [resolvable:$true] %s35
      %s37 = sshll.u32 [#allocation4], 4
      %s38 = int_to_ptr.vmem [resolvable:$true] %s37
      %43 = dma.hbm_to_vmem [thread:$0]  %s36, 10240, %s38, [#allocation5], 128, 128, 8
    $region17: #{forward.1} parent=1 // pred_fallthru
      _
    // Predicated region
    $region18: #{forward.1} parent=1 // pred_check
      _
    $region19: #{forward.1} parent=1 // pred_check_branch
      %45 = sbr.rel (0) target = $region21
    $region20: #{forward.1} parent=1 // pred_region
      %47 = vsyncadd [#allocation5], 0
      %s48 = sshll.u32 %s4, 4
      %s49 = int_to_ptr.hbm [resolvable:$true] %s48
      %s50 = sshll.u32 [#allocation6], 4
      %s51 = int_to_ptr.vmem [resolvable:$true] %s50
      %56 = dma.hbm_to_vmem [thread:$0]  %s49, 2560, %s51, [#allocation5], 128, 128, 8
    $region21: #{forward.1} parent=1 // pred_fallthru
      _
    // Predicated region
    $region22: #{forward.1} parent=1 // pred_check
      _
    $region23: #{forward.1} parent=1 // pred_check_branch
      %58 = sbr.rel (0) target = $region25
    $region24: #{forward.1} parent=1 // pred_region
      %60 = vsyncadd [#allocation8], 0
      %s61 = sshll.u32 %s5, 4
      %s62 = int_to_ptr.hbm [resolvable:$true] %s61
      %s63 = sshll.u32 [#allocation7], 4
      %s64 = int_to_ptr.vmem [resolvable:$true] %s63
      %69 = dma.hbm_to_vmem [thread:$0]  %s62, 2560, %s64, [#allocation8], 128, 128, 8
    $region25: #{forward.1} parent=1 // pred_fallthru
      _
    // Predicated region
    $region26: #{forward.1} parent=1 // pred_check
      _
    $region27: #{forward.1} parent=1 // pred_check_branch
      %71 = sbr.rel (0) target = $region29
    $region28: #{forward.1} parent=1 // pred_region
      %73 = dma.done [#allocation3], 10240
    $region29: #{forward.1} parent=1 // pred_fallthru
      _
    // Predicated region
    $region30: #{forward.1} parent=1 // pred_check
      _
    $region31: #{forward.1} parent=1 // pred_check_branch
      %75 = sbr.rel (0) target = $region33
    $region32: #{forward.1} parent=1 // pred_region
      %77 = dma.done [#allocation5], 10240
    $region33: #{forward.1} parent=1 // pred_fallthru
      _
    // Predicated region
    $region34: #{forward.1} parent=1 // pred_check
      _
    $region35: #{forward.1} parent=1 // pred_check_branch
      %79 = sbr.rel (0) target = $region37
    $region36: #{forward.1} parent=1 // pred_region
      %81 = dma.done [#allocation5], 2560
    $region37: #{forward.1} parent=1 // pred_fallthru
      _
    // Predicated region
    $region38: #{forward.1} parent=1 // pred_check
      _
    $region39: #{forward.1} parent=1 // pred_check_branch
      %83 = sbr.rel (0) target = $region41
    $region40: #{forward.1} parent=1 // pred_region
      %85 = dma.done [#allocation8], 2560
    $region41: #{forward.1} parent=1 // pred_fallthru
      _
    %v86 = vld [vmem:[#allocation2] sm:$0xff]
    %v87 = vld [vmem:[#allocation2 + $0x8] sm:$0xff]
    %v88 = vld [vmem:[#allocation2 + $0x10] sm:$0xff]
    %v89 = vld [vmem:[#allocation2 + $0x18] sm:$0xff]
    %v90 = vld [vmem:[#allocation2 + $0x20] sm:$0xff]
    %v91 = vld [vmem:[#allocation2 + $0x28] sm:$0xff]
    %v92 = vld [vmem:[#allocation2 + $0x30] sm:$0xff]
    %v93 = vld [vmem:[#allocation2 + $0x38] sm:$0xff]
    %v94 = vld [vmem:[#allocation2 + $0x40] sm:$0xff]
    %v95 = vld [vmem:[#allocation2 + $0x48] sm:$0xff]
    %v96 = vld [vmem:[#allocation2 + $0x50] sm:$0xff]
    %v97 = vld [vmem:[#allocation2 + $0x58] sm:$0xff]
    %v98 = vld [vmem:[#allocation2 + $0x60] sm:$0xff]
    %v99 = vld [vmem:[#allocation2 + $0x68] sm:$0xff]
    %v100 = vld [vmem:[#allocation2 + $0x70] sm:$0xff]
    %v101 = vld [vmem:[#allocation2 + $0x78] sm:$0xff]
    %v102 = vld [vmem:[#allocation2 + $0x80] sm:$0xff]
    %v103 = vld [vmem:[#allocation2 + $0x88] sm:$0xff]
    %v104 = vld [vmem:[#allocation2 + $0x90] sm:$0xff]
    %v105 = vld [vmem:[#allocation2 + $0x98] sm:$0xff]
    %v106 = vld [vmem:[#allocation2 + $0xa0] sm:$0xff]
    %v107 = vld [vmem:[#allocation2 + $0xa8] sm:$0xff]
    %v108 = vld [vmem:[#allocation2 + $0xb0] sm:$0xff]
    %v109 = vld [vmem:[#allocation2 + $0xb8] sm:$0xff]
    %v110 = vld [vmem:[#allocation2 + $0xc0] sm:$0xff]
    %v111 = vld [vmem:[#allocation2 + $0xc8] sm:$0xff]
    %v112 = vld [vmem:[#allocation2 + $0xd0] sm:$0xff]
    %v113 = vld [vmem:[#allocation2 + $0xd8] sm:$0xff]
    %v114 = vld [vmem:[#allocation2 + $0xe0] sm:$0xff]
    %v115 = vld [vmem:[#allocation2 + $0xe8] sm:$0xff]
    %v116 = vld [vmem:[#allocation2 + $0xf0] sm:$0xff]
    %v117 = vld [vmem:[#allocation2 + $0xf8] sm:$0xff]
    %v118 = vld [vmem:[#allocation2 + $0x100] sm:$0xff]
    %v119 = vld [vmem:[#allocation2 + $0x108] sm:$0xff]
    %v120 = vld [vmem:[#allocation2 + $0x110] sm:$0xff]
    %v121 = vld [vmem:[#allocation2 + $0x118] sm:$0xff]
    %v122 = vld [vmem:[#allocation2 + $0x140] sm:$0xff]
    %v123 = vld [vmem:[#allocation2 + $0x148] sm:$0xff]
    %v124 = vld [vmem:[#allocation2 + $0x150] sm:$0xff]
    %v125 = vld [vmem:[#allocation2 + $0x158] sm:$0xff]
    %v126 = vld [vmem:[#allocation2 + $0x180] sm:$0xff]
    %v127 = vld [vmem:[#allocation2 + $0x188] sm:$0xff]
    %v128 = vld [vmem:[#allocation2 + $0x190] sm:$0xff]
    %v129 = vld [vmem:[#allocation2 + $0x198] sm:$0xff]
    %v130 = vld [vmem:[#allocation2 + $0x1a0] sm:$0xff]
    %v131 = vld [vmem:[#allocation2 + $0x1a8] sm:$0xff]
    %v132 = vld [vmem:[#allocation2 + $0x1c0] sm:$0xff]
    %v133 = vld [vmem:[#allocation2 + $0x1c8] sm:$0xff]
    %v134 = vld [vmem:[#allocation2 + $0x1d0] sm:$0xff]
    %v135 = vld [vmem:[#allocation2 + $0x1d8] sm:$0xff]
    %v136 = vld [vmem:[#allocation2 + $0x1e0] sm:$0xff]
    %v137 = vld [vmem:[#allocation2 + $0x1e8] sm:$0xff]
    %v138 = vld [vmem:[#allocation2 + $0x200] sm:$0xff]
    %v139 = vld [vmem:[#allocation2 + $0x208] sm:$0xff]
    %v140 = vld [vmem:[#allocation2 + $0x210] sm:$0xff]
    %v141 = vld [vmem:[#allocation2 + $0x218] sm:$0xff]
    %v142 = vld [vmem:[#allocation2 + $0x240] sm:$0xff]
    %v143 = vld [vmem:[#allocation2 + $0x248] sm:$0xff]
    %v144 = vld [vmem:[#allocation2 + $0x250] sm:$0xff]
    %v145 = vld [vmem:[#allocation2 + $0x258] sm:$0xff]
    %v146 = vld [vmem:[#allocation4] sm:$0xff]
    %v147 = vld [vmem:[#allocation4 + $0x8] sm:$0xff]
    %v148 = vld [vmem:[#allocation4 + $0x10] sm:$0xff]
    %v149 = vld [vmem:[#allocation4 + $0x18] sm:$0xff]
    %v150 = vld [vmem:[#allocation4 + $0x20] sm:$0xff]
    %v151 = vld [vmem:[#allocation4 + $0x28] sm:$0xff]
    %v152 = vld [vmem:[#allocation4 + $0x30] sm:$0xff]
    %v153 = vld [vmem:[#allocation4 + $0x38] sm:$0xff]
    %v154 = vld [vmem:[#allocation4 + $0x40] sm:$0xff]
    %v155 = vld [vmem:[#allocation4 + $0x48] sm:$0xff]
    %v156 = vld [vmem:[#allocation4 + $0x50] sm:$0xff]
    %v157 = vld [vmem:[#allocation4 + $0x58] sm:$0xff]
    %v158 = vld [vmem:[#allocation4 + $0x60] sm:$0xff]
    %v159 = vld [vmem:[#allocation4 + $0x68] sm:$0xff]
    %v160 = vld [vmem:[#allocation4 + $0x70] sm:$0xff]
    %v161 = vld [vmem:[#allocation4 + $0x78] sm:$0xff]
    %v162 = vld [vmem:[#allocation4 + $0x80] sm:$0xff]
    %v163 = vld [vmem:[#allocation4 + $0x88] sm:$0xff]
    %v164 = vld [vmem:[#allocation4 + $0x90] sm:$0xff]
    %v165 = vld [vmem:[#allocation4 + $0x98] sm:$0xff]
    %v166 = vld [vmem:[#allocation4 + $0xa0] sm:$0xff]
    %v167 = vld [vmem:[#allocation4 + $0xa8] sm:$0xff]
    %v168 = vld [vmem:[#allocation4 + $0xb0] sm:$0xff]
    %v169 = vld [vmem:[#allocation4 + $0xb8] sm:$0xff]
    %v170 = vld [vmem:[#allocation4 + $0xc0] sm:$0xff]
    %v171 = vld [vmem:[#allocation4 + $0xc8] sm:$0xff]
    %v172 = vld [vmem:[#allocation4 + $0xd0] sm:$0xff]
    %v173 = vld [vmem:[#allocation4 + $0xd8] sm:$0xff]
    %v174 = vld [vmem:[#allocation4 + $0xe0] sm:$0xff]
    %v175 = vld [vmem:[#allocation4 + $0xe8] sm:$0xff]
    %v176 = vld [vmem:[#allocation4 + $0xf0] sm:$0xff]
    %v177 = vld [vmem:[#allocation4 + $0xf8] sm:$0xff]
    %v178 = vld [vmem:[#allocation4 + $0x100] sm:$0xff]
    %v179 = vld [vmem:[#allocation4 + $0x108] sm:$0xff]
    %v180 = vld [vmem:[#allocation4 + $0x110] sm:$0xff]
    %v181 = vld [vmem:[#allocation4 + $0x118] sm:$0xff]
    %v182 = vld [vmem:[#allocation4 + $0x140] sm:$0xff]
    %v183 = vld [vmem:[#allocation4 + $0x148] sm:$0xff]
    %v184 = vld [vmem:[#allocation4 + $0x150] sm:$0xff]
    %v185 = vld [vmem:[#allocation4 + $0x158] sm:$0xff]
    %v186 = vld [vmem:[#allocation4 + $0x180] sm:$0xff]
    %v187 = vld [vmem:[#allocation4 + $0x188] sm:$0xff]
    %v188 = vld [vmem:[#allocation4 + $0x190] sm:$0xff]
    %v189 = vld [vmem:[#allocation4 + $0x198] sm:$0xff]
    %v190 = vld [vmem:[#allocation4 + $0x1a0] sm:$0xff]
    %v191 = vld [vmem:[#allocation4 + $0x1a8] sm:$0xff]
    %v192 = vld [vmem:[#allocation4 + $0x1c0] sm:$0xff]
    %v193 = vld [vmem:[#allocation4 + $0x1c8] sm:$0xff]
    %v194 = vld [vmem:[#allocation4 + $0x1d0] sm:$0xff]
    %v195 = vld [vmem:[#allocation4 + $0x1d8] sm:$0xff]
    %v196 = vld [vmem:[#allocation4 + $0x1e0] sm:$0xff]
    %v197 = vld [vmem:[#allocation4 + $0x1e8] sm:$0xff]
    %v198 = vld [vmem:[#allocation4 + $0x200] sm:$0xff]
    %v199 = vld [vmem:[#allocation4 + $0x208] sm:$0xff]
    %v200 = vld [vmem:[#allocation4 + $0x210] sm:$0xff]
    %v201 = vld [vmem:[#allocation4 + $0x218] sm:$0xff]
    %v202 = vld [vmem:[#allocation4 + $0x240] sm:$0xff]
    %v203 = vld [vmem:[#allocation4 + $0x248] sm:$0xff]
    %v204 = vld [vmem:[#allocation4 + $0x250] sm:$0xff]
    %v205 = vld [vmem:[#allocation4 + $0x258] sm:$0xff]
    %v206 = vld [vmem:[#allocation6] sm:$0xff]
    %v207 = vld [vmem:[#allocation6 + $0x8] sm:$0xff]
    %v208 = vld [vmem:[#allocation6 + $0x10] sm:$0xff]
    %v209 = vld [vmem:[#allocation6 + $0x18] sm:$0xff]
    %v210 = vld [vmem:[#allocation6 + $0x20] sm:$0xff]
    %v211 = vld [vmem:[#allocation6 + $0x28] sm:$0xff]
    %v212 = vld [vmem:[#allocation6 + $0x30] sm:$0xff]
    %v213 = vld [vmem:[#allocation6 + $0x38] sm:$0xff]
    %v214 = vld [vmem:[#allocation6 + $0x40] sm:$0xff]
    %v215 = vld [vmem:[#allocation6 + $0x50] sm:$0xff]
    %v216 = vld [vmem:[#allocation6 + $0x60] sm:$0xff]
    %v217 = vld [vmem:[#allocation6 + $0x70] sm:$0xff]
    %v218 = vld [vmem:[#allocation6 + $0x80] sm:$0xff]
    %v219 = vld [vmem:[#allocation6 + $0x90] sm:$0xff]
    %v220 = vld [vmem:[#allocation7] sm:$0xff]
    %v221 = vld [vmem:[#allocation7 + $0x8] sm:$0xff]
    %v222 = vld [vmem:[#allocation7 + $0x10] sm:$0xff]
    %v223 = vld [vmem:[#allocation7 + $0x18] sm:$0xff]
    %v224 = vld [vmem:[#allocation7 + $0x20] sm:$0xff]
    %v225 = vld [vmem:[#allocation7 + $0x28] sm:$0xff]
    %v226 = vld [vmem:[#allocation7 + $0x30] sm:$0xff]
    %v227 = vld [vmem:[#allocation7 + $0x38] sm:$0xff]
    %v228 = vld [vmem:[#allocation7 + $0x40] sm:$0xff]
    %v229 = vld [vmem:[#allocation7 + $0x50] sm:$0xff]
    %v230 = vld [vmem:[#allocation7 + $0x60] sm:$0xff]
    %v231 = vld [vmem:[#allocation7 + $0x70] sm:$0xff]
    %v232 = vld [vmem:[#allocation7 + $0x80] sm:$0xff]
    %v233 = vld [vmem:[#allocation7 + $0x90] sm:$0xff]
    %v234 = vld [vmem:[%s0] sm:$0xff]
    %v235 = vld [vmem:[%s1] sm:$0xff]
    %237 = vset.pattern.permute.xlu0 0
    %238 = vperm.xlu0 %237, %v146
    %v239 = vpop.permute.xlu0 %238
    %242 = vset.pattern.permute.xlu0 0
    %243 = vperm.xlu0 %242, %v147
    %v244 = vpop.permute.xlu0 %243
    %247 = vset.pattern.permute.xlu0 0
    %248 = vperm.xlu0 %247, %v148
    %v249 = vpop.permute.xlu0 %248
    %252 = vset.pattern.permute.xlu0 0
    %253 = vperm.xlu0 %252, %v149
    %v254 = vpop.permute.xlu0 %253
    %257 = vset.pattern.permute.xlu0 0
    %258 = vperm.xlu0 %257, %v150
    %v259 = vpop.permute.xlu0 %258
    %262 = vset.pattern.permute.xlu0 0
    %263 = vperm.xlu0 %262, %v151
    %v264 = vpop.permute.xlu0 %263
    %267 = vset.pattern.permute.xlu0 0
    %268 = vperm.xlu0 %267, %v152
    %v269 = vpop.permute.xlu0 %268
    %272 = vset.pattern.permute.xlu0 0
    %273 = vperm.xlu0 %272, %v153
    %v274 = vpop.permute.xlu0 %273
    %vm276 = vcmask 64512
    %v278 = vsel %vm276, %v86, 0
    %v281 = vsel %vm276, %v87, 0
    %v284 = vsel %vm276, %v88, 0
    %v287 = vsel %vm276, %v89, 0
    %v290 = vsel %vm276, %v90, 0
    %v293 = vsel %vm276, %v91, 0
    %v296 = vsel %vm276, %v92, 0
    %v299 = vsel %vm276, %v93, 0
    %301 = vmatpush.msra.mxu0 0.0
    %302 = vmatpush.msra.mxu0 0.0
    %303 = vmatpush.msra.mxu0 0.0
    %304 = vmatpush.msra.mxu0 0.0
    %305 = vmatpush.msra.mxu0 0.0
    %306 = vmatpush.msra.mxu0 0.0
    %307 = vmatpush.msra.mxu0 0.0
    %308 = vmatpush.msra.mxu0 0.0
    %309 = vmatpush.msra.mxu0 0.0
    %310 = vmatpush.msra.mxu0 0.0
    %311 = vmatpush.msra.mxu0 0.0
    %312 = vmatpush.msra.mxu0 0.0
    %313 = vmatpush.msra.mxu0 0.0
    %314 = vmatpush.msra.mxu0 0.0
    %315 = vmatpush.msra.mxu0 0.0
    %316 = vmatpush.msra.mxu0 %v235
    %317 = vmatmul.f32.gmra.mxu0 %v278
    %v318 = vpop.f32.mrf.mxu0
    %v319 = vadd.f32 %v239, %v318
    %320 = vmatmul.f32.gmra.mxu0 %v281
    %v321 = vpop.f32.mrf.mxu0
    %v322 = vadd.f32 %v244, %v321
    %323 = vmatmul.f32.gmra.mxu0 %v284
    %v324 = vpop.f32.mrf.mxu0
    %v325 = vadd.f32 %v249, %v324
    %326 = vmatmul.f32.gmra.mxu0 %v287
    %v327 = vpop.f32.mrf.mxu0
    %v328 = vadd.f32 %v254, %v327
    %329 = vmatmul.f32.gmra.mxu0 %v290
    %v330 = vpop.f32.mrf.mxu0
    %v331 = vadd.f32 %v259, %v330
    %332 = vmatmul.f32.gmra.mxu0 %v293
    %v333 = vpop.f32.mrf.mxu0
    %v334 = vadd.f32 %v264, %v333
    %335 = vmatmul.f32.gmra.mxu0 %v296
    %v336 = vpop.f32.mrf.mxu0
    %v337 = vadd.f32 %v269, %v336
    %338 = vmatmul.f32.gmra.mxu0 %v299
    %v339 = vpop.f32.mrf.mxu0
    %v340 = vadd.f32 %v274, %v339
    %341 = vdwg.mxu0
    %v342 = vtanh.pop %v319
    %v343 = vtanh.pop %v322
    %v344 = vtanh.pop %v325
    %v345 = vtanh.pop %v328
    %v346 = vtanh.pop %v331
    %v347 = vtanh.pop %v334
    %v348 = vtanh.pop %v337
    %v349 = vtanh.pop %v340
    %351 = vset.pattern.permute.xlu0 0
    %352 = vperm.xlu0 %351, %v220
    %v353 = vpop.permute.xlu0 %352
    %356 = vset.pattern.permute.xlu0 0
    %357 = vperm.xlu0 %356, %v221
    %v358 = vpop.permute.xlu0 %357
    %vm360 = vcmask 523264
    %v362 = vsel %vm360, %v206, 0
    %v365 = vsel %vm360, %v207, 0
    %367 = vmatpush.msra.mxu0 0.0
    %368 = vmatpush.msra.mxu0 0.0
    %369 = vmatpush.msra.mxu0 0.0
    %370 = vmatpush.msra.mxu0 0.0
    %371 = vmatpush.msra.mxu0 0.0
    %372 = vmatpush.msra.mxu0 0.0
    %373 = vmatpush.msra.mxu0 0.0
    %374 = vmatpush.msra.mxu0 0.0
    %375 = vmatpush.msra.mxu0 %v349
    %376 = vmatpush.msra.mxu0 %v348
    %377 = vmatpush.msra.mxu0 %v347
    %378 = vmatpush.msra.mxu0 %v346
    %379 = vmatpush.msra.mxu0 %v345
    %380 = vmatpush.msra.mxu0 %v344
    %381 = vmatpush.msra.mxu0 %v343
    %382 = vmatpush.msra.mxu0 %v342
    %383 = vmatmul.f32.gmra.mxu0 %v362
    %v384 = vpop.f32.mrf.mxu0
    %v385 = vadd.f32 %v353, %v384
    %386 = vmatmul.f32.gmra.mxu0 %v365
    %v387 = vpop.f32.mrf.mxu0
    %v388 = vadd.f32 %v358, %v387
    %389 = vdwg.mxu0
    %v390 = vtanh.pop %v385
    %v391 = vmul.f32 %v390, 1.442695
    %v392 = vpow.pop %v391
    %v393 = vmul.f32 %v235, %v392
    %v394 = vadd.f32 %v393, %v388
    %396 = vset.pattern.permute.xlu0 0
    %397 = vperm.xlu0 %396, %v154
    %v398 = vpop.permute.xlu0 %397
    %401 = vset.pattern.permute.xlu0 0
    %402 = vperm.xlu0 %401, %v155
    %v403 = vpop.permute.xlu0 %402
    %406 = vset.pattern.permute.xlu0 0
    %407 = vperm.xlu0 %406, %v156
    %v408 = vpop.permute.xlu0 %407
    %411 = vset.pattern.permute.xlu0 0
    %412 = vperm.xlu0 %411, %v157
    %v413 = vpop.permute.xlu0 %412
    %416 = vset.pattern.permute.xlu0 0
    %417 = vperm.xlu0 %416, %v158
    %v418 = vpop.permute.xlu0 %417
    %421 = vset.pattern.permute.xlu0 0
    %422 = vperm.xlu0 %421, %v159
    %v423 = vpop.permute.xlu0 %422
    %426 = vset.pattern.permute.xlu0 0
    %427 = vperm.xlu0 %426, %v160
    %v428 = vpop.permute.xlu0 %427
    %431 = vset.pattern.permute.xlu0 0
    %432 = vperm.xlu0 %431, %v161
    %v433 = vpop.permute.xlu0 %432
    %v436 = vsel %vm276, %v94, 0
    %v439 = vsel %vm276, %v95, 0
    %v442 = vsel %vm276, %v96, 0
    %v445 = vsel %vm276, %v97, 0
    %v448 = vsel %vm276, %v98, 0
    %v451 = vsel %vm276, %v99, 0
    %v454 = vsel %vm276, %v100, 0
    %v457 = vsel %vm276, %v101, 0
    %459 = vmatpush.msra.mxu0 0.0
    %460 = vmatpush.msra.mxu0 0.0
    %461 = vmatpush.msra.mxu0 0.0
    %462 = vmatpush.msra.mxu0 0.0
    %463 = vmatpush.msra.mxu0 0.0
    %464 = vmatpush.msra.mxu0 0.0
    %465 = vmatpush.msra.mxu0 0.0
    %466 = vmatpush.msra.mxu0 0.0
    %467 = vmatpush.msra.mxu0 0.0
    %468 = vmatpush.msra.mxu0 0.0
    %469 = vmatpush.msra.mxu0 0.0
    %470 = vmatpush.msra.mxu0 0.0
    %471 = vmatpush.msra.mxu0 0.0
    %472 = vmatpush.msra.mxu0 0.0
    %473 = vmatpush.msra.mxu0 0.0
    %474 = vmatpush.msra.mxu0 %v394
    %475 = vmatmul.f32.gmra.mxu0 %v436
    %v476 = vpop.f32.mrf.mxu0
    %v477 = vadd.f32 %v398, %v476
    %478 = vmatmul.f32.gmra.mxu0 %v439
    %v479 = vpop.f32.mrf.mxu0
    %v480 = vadd.f32 %v403, %v479
    %481 = vmatmul.f32.gmra.mxu0 %v442
    %v482 = vpop.f32.mrf.mxu0
    %v483 = vadd.f32 %v408, %v482
    %484 = vmatmul.f32.gmra.mxu0 %v445
    %v485 = vpop.f32.mrf.mxu0
    %v486 = vadd.f32 %v413, %v485
    %487 = vmatmul.f32.gmra.mxu0 %v448
    %v488 = vpop.f32.mrf.mxu0
    %v489 = vadd.f32 %v418, %v488
    %490 = vmatmul.f32.gmra.mxu0 %v451
    %v491 = vpop.f32.mrf.mxu0
    %v492 = vadd.f32 %v423, %v491
    %493 = vmatmul.f32.gmra.mxu0 %v454
    %v494 = vpop.f32.mrf.mxu0
    %v495 = vadd.f32 %v428, %v494
    %496 = vmatmul.f32.gmra.mxu0 %v457
    %v497 = vpop.f32.mrf.mxu0
    %v498 = vadd.f32 %v433, %v497
    %499 = vdwg.mxu0
    %v500 = vtanh.pop %v477
    %v501 = vtanh.pop %v480
    %v502 = vtanh.pop %v483
    %v503 = vtanh.pop %v486
    %v504 = vtanh.pop %v489
    %v505 = vtanh.pop %v492
    %v506 = vtanh.pop %v495
    %v507 = vtanh.pop %v498
    %509 = vset.pattern.permute.xlu0 0
    %510 = vperm.xlu0 %509, %v222
    %v511 = vpop.permute.xlu0 %510
    %514 = vset.pattern.permute.xlu0 0
    %515 = vperm.xlu0 %514, %v223
    %v516 = vpop.permute.xlu0 %515
    %v519 = vsel %vm360, %v208, 0
    %v522 = vsel %vm360, %v209, 0
    %524 = vmatpush.msra.mxu0 0.0
    %525 = vmatpush.msra.mxu0 0.0
    %526 = vmatpush.msra.mxu0 0.0
    %527 = vmatpush.msra.mxu0 0.0
    %528 = vmatpush.msra.mxu0 0.0
    %529 = vmatpush.msra.mxu0 0.0
    %530 = vmatpush.msra.mxu0 0.0
    %531 = vmatpush.msra.mxu0 0.0
    %532 = vmatpush.msra.mxu0 %v507
    %533 = vmatpush.msra.mxu0 %v506
    %534 = vmatpush.msra.mxu0 %v505
    %535 = vmatpush.msra.mxu0 %v504
    %536 = vmatpush.msra.mxu0 %v503
    %537 = vmatpush.msra.mxu0 %v502
    %538 = vmatpush.msra.mxu0 %v501
    %539 = vmatpush.msra.mxu0 %v500
    %540 = vmatmul.f32.gmra.mxu0 %v519
    %v541 = vpop.f32.mrf.mxu0
    %v542 = vadd.f32 %v511, %v541
    %543 = vmatmul.f32.gmra.mxu0 %v522
    %v544 = vpop.f32.mrf.mxu0
    %v545 = vadd.f32 %v516, %v544
    %546 = vdwg.mxu0
    %v547 = vtanh.pop %v542
    %v548 = vmul.f32 %v547, 1.442695
    %v549 = vpow.pop %v548
    %v550 = vmul.f32 %v394, %v549
    %v551 = vadd.f32 %v550, %v545
    %553 = vset.pattern.permute.xlu0 0
    %554 = vperm.xlu0 %553, %v162
    %v555 = vpop.permute.xlu0 %554
    %558 = vset.pattern.permute.xlu0 0
    %559 = vperm.xlu0 %558, %v163
    %v560 = vpop.permute.xlu0 %559
    %563 = vset.pattern.permute.xlu0 0
    %564 = vperm.xlu0 %563, %v164
    %v565 = vpop.permute.xlu0 %564
    %568 = vset.pattern.permute.xlu0 0
    %569 = vperm.xlu0 %568, %v165
    %v570 = vpop.permute.xlu0 %569
    %573 = vset.pattern.permute.xlu0 0
    %574 = vperm.xlu0 %573, %v166
    %v575 = vpop.permute.xlu0 %574
    %578 = vset.pattern.permute.xlu0 0
    %579 = vperm.xlu0 %578, %v167
    %v580 = vpop.permute.xlu0 %579
    %583 = vset.pattern.permute.xlu0 0
    %584 = vperm.xlu0 %583, %v168
    %v585 = vpop.permute.xlu0 %584
    %588 = vset.pattern.permute.xlu0 0
    %589 = vperm.xlu0 %588, %v169
    %v590 = vpop.permute.xlu0 %589
    %v593 = vsel %vm276, %v102, 0
    %v596 = vsel %vm276, %v103, 0
    %v599 = vsel %vm276, %v104, 0
    %v602 = vsel %vm276, %v105, 0
    %v605 = vsel %vm276, %v106, 0
    %v608 = vsel %vm276, %v107, 0
    %v611 = vsel %vm276, %v108, 0
    %v614 = vsel %vm276, %v109, 0
    %616 = vmatpush.msra.mxu0 0.0
    %617 = vmatpush.msra.mxu0 0.0
    %618 = vmatpush.msra.mxu0 0.0
    %619 = vmatpush.msra.mxu0 0.0
    %620 = vmatpush.msra.mxu0 0.0
    %621 = vmatpush.msra.mxu0 0.0
    %622 = vmatpush.msra.mxu0 0.0
    %623 = vmatpush.msra.mxu0 0.0
    %624 = vmatpush.msra.mxu0 0.0
    %625 = vmatpush.msra.mxu0 0.0
    %626 = vmatpush.msra.mxu0 0.0
    %627 = vmatpush.msra.mxu0 0.0
    %628 = vmatpush.msra.mxu0 0.0
    %629 = vmatpush.msra.mxu0 0.0
    %630 = vmatpush.msra.mxu0 0.0
    %631 = vmatpush.msra.mxu0 %v551
    %632 = vmatmul.f32.gmra.mxu0 %v593
    %v633 = vpop.f32.mrf.mxu0
    %v634 = vadd.f32 %v555, %v633
    %635 = vmatmul.f32.gmra.mxu0 %v596
    %v636 = vpop.f32.mrf.mxu0
    %v637 = vadd.f32 %v560, %v636
    %638 = vmatmul.f32.gmra.mxu0 %v599
    %v639 = vpop.f32.mrf.mxu0
    %v640 = vadd.f32 %v565, %v639
    %641 = vmatmul.f32.gmra.mxu0 %v602
    %v642 = vpop.f32.mrf.mxu0
    %v643 = vadd.f32 %v570, %v642
    %644 = vmatmul.f32.gmra.mxu0 %v605
    %v645 = vpop.f32.mrf.mxu0
    %v646 = vadd.f32 %v575, %v645
    %647 = vmatmul.f32.gmra.mxu0 %v608
    %v648 = vpop.f32.mrf.mxu0
    %v649 = vadd.f32 %v580, %v648
    %650 = vmatmul.f32.gmra.mxu0 %v611
    %v651 = vpop.f32.mrf.mxu0
    %v652 = vadd.f32 %v585, %v651
    %653 = vmatmul.f32.gmra.mxu0 %v614
    %v654 = vpop.f32.mrf.mxu0
    %v655 = vadd.f32 %v590, %v654
    %656 = vdwg.mxu0
    %v657 = vtanh.pop %v634
    %v658 = vtanh.pop %v637
    %v659 = vtanh.pop %v640
    %v660 = vtanh.pop %v643
    %v661 = vtanh.pop %v646
    %v662 = vtanh.pop %v649
    %v663 = vtanh.pop %v652
    %v664 = vtanh.pop %v655
    %666 = vset.pattern.permute.xlu0 0
    %667 = vperm.xlu0 %666, %v224
    %v668 = vpop.permute.xlu0 %667
    %671 = vset.pattern.permute.xlu0 0
    %672 = vperm.xlu0 %671, %v225
    %v673 = vpop.permute.xlu0 %672
    %v676 = vsel %vm360, %v210, 0
    %v679 = vsel %vm360, %v211, 0
    %681 = vmatpush.msra.mxu0 0.0
    %682 = vmatpush.msra.mxu0 0.0
    %683 = vmatpush.msra.mxu0 0.0
    %684 = vmatpush.msra.mxu0 0.0
    %685 = vmatpush.msra.mxu0 0.0
    %686 = vmatpush.msra.mxu0 0.0
    %687 = vmatpush.msra.mxu0 0.0
    %688 = vmatpush.msra.mxu0 0.0
    %689 = vmatpush.msra.mxu0 %v664
    %690 = vmatpush.msra.mxu0 %v663
    %691 = vmatpush.msra.mxu0 %v662
    %692 = vmatpush.msra.mxu0 %v661
    %693 = vmatpush.msra.mxu0 %v660
    %694 = vmatpush.msra.mxu0 %v659
    %695 = vmatpush.msra.mxu0 %v658
    %696 = vmatpush.msra.mxu0 %v657
    %697 = vmatmul.f32.gmra.mxu0 %v676
    %v698 = vpop.f32.mrf.mxu0
    %v699 = vadd.f32 %v668, %v698
    %700 = vmatmul.f32.gmra.mxu0 %v679
    %v701 = vpop.f32.mrf.mxu0
    %v702 = vadd.f32 %v673, %v701
    %703 = vdwg.mxu0
    %v704 = vtanh.pop %v699
    %v705 = vmul.f32 %v704, 1.442695
    %v706 = vpow.pop %v705
    %v707 = vmul.f32 %v551, %v706
    %v708 = vadd.f32 %v707, %v702
    %710 = vset.pattern.permute.xlu0 0
    %711 = vperm.xlu0 %710, %v170
    %v712 = vpop.permute.xlu0 %711
    %715 = vset.pattern.permute.xlu0 0
    %716 = vperm.xlu0 %715, %v171
    %v717 = vpop.permute.xlu0 %716
    %720 = vset.pattern.permute.xlu0 0
    %721 = vperm.xlu0 %720, %v172
    %v722 = vpop.permute.xlu0 %721
    %725 = vset.pattern.permute.xlu0 0
    %726 = vperm.xlu0 %725, %v173
    %v727 = vpop.permute.xlu0 %726
    %730 = vset.pattern.permute.xlu0 0
    %731 = vperm.xlu0 %730, %v174
    %v732 = vpop.permute.xlu0 %731
    %735 = vset.pattern.permute.xlu0 0
    %736 = vperm.xlu0 %735, %v175
    %v737 = vpop.permute.xlu0 %736
    %740 = vset.pattern.permute.xlu0 0
    %741 = vperm.xlu0 %740, %v176
    %v742 = vpop.permute.xlu0 %741
    %745 = vset.pattern.permute.xlu0 0
    %746 = vperm.xlu0 %745, %v177
    %v747 = vpop.permute.xlu0 %746
    %v750 = vsel %vm276, %v110, 0
    %v753 = vsel %vm276, %v111, 0
    %v756 = vsel %vm276, %v112, 0
    %v759 = vsel %vm276, %v113, 0
    %v762 = vsel %vm276, %v114, 0
    %v765 = vsel %vm276, %v115, 0
    %v768 = vsel %vm276, %v116, 0
    %v771 = vsel %vm276, %v117, 0
    %773 = vmatpush.msra.mxu0 0.0
    %774 = vmatpush.msra.mxu0 0.0
    %775 = vmatpush.msra.mxu0 0.0
    %776 = vmatpush.msra.mxu0 0.0
    %777 = vmatpush.msra.mxu0 0.0
    %778 = vmatpush.msra.mxu0 0.0
    %779 = vmatpush.msra.mxu0 0.0
    %780 = vmatpush.msra.mxu0 0.0
    %781 = vmatpush.msra.mxu0 0.0
    %782 = vmatpush.msra.mxu0 0.0
    %783 = vmatpush.msra.mxu0 0.0
    %784 = vmatpush.msra.mxu0 0.0
    %785 = vmatpush.msra.mxu0 0.0
    %786 = vmatpush.msra.mxu0 0.0
    %787 = vmatpush.msra.mxu0 0.0
    %788 = vmatpush.msra.mxu0 %v708
    %789 = vmatmul.f32.gmra.mxu0 %v750
    %v790 = vpop.f32.mrf.mxu0
    %v791 = vadd.f32 %v712, %v790
    %792 = vmatmul.f32.gmra.mxu0 %v753
    %v793 = vpop.f32.mrf.mxu0
    %v794 = vadd.f32 %v717, %v793
    %795 = vmatmul.f32.gmra.mxu0 %v756
    %v796 = vpop.f32.mrf.mxu0
    %v797 = vadd.f32 %v722, %v796
    %798 = vmatmul.f32.gmra.mxu0 %v759
    %v799 = vpop.f32.mrf.mxu0
    %v800 = vadd.f32 %v727, %v799
    %801 = vmatmul.f32.gmra.mxu0 %v762
    %v802 = vpop.f32.mrf.mxu0
    %v803 = vadd.f32 %v732, %v802
    %804 = vmatmul.f32.gmra.mxu0 %v765
    %v805 = vpop.f32.mrf.mxu0
    %v806 = vadd.f32 %v737, %v805
    %807 = vmatmul.f32.gmra.mxu0 %v768
    %v808 = vpop.f32.mrf.mxu0
    %v809 = vadd.f32 %v742, %v808
    %810 = vmatmul.f32.gmra.mxu0 %v771
    %v811 = vpop.f32.mrf.mxu0
    %v812 = vadd.f32 %v747, %v811
    %813 = vdwg.mxu0
    %v814 = vtanh.pop %v791
    %v815 = vtanh.pop %v794
    %v816 = vtanh.pop %v797
    %v817 = vtanh.pop %v800
    %v818 = vtanh.pop %v803
    %v819 = vtanh.pop %v806
    %v820 = vtanh.pop %v809
    %v821 = vtanh.pop %v812
    %823 = vset.pattern.permute.xlu0 0
    %824 = vperm.xlu0 %823, %v226
    %v825 = vpop.permute.xlu0 %824
    %828 = vset.pattern.permute.xlu0 0
    %829 = vperm.xlu0 %828, %v227
    %v830 = vpop.permute.xlu0 %829
    %v833 = vsel %vm360, %v212, 0
    %v836 = vsel %vm360, %v213, 0
    %838 = vmatpush.msra.mxu0 0.0
    %839 = vmatpush.msra.mxu0 0.0
    %840 = vmatpush.msra.mxu0 0.0
    %841 = vmatpush.msra.mxu0 0.0
    %842 = vmatpush.msra.mxu0 0.0
    %843 = vmatpush.msra.mxu0 0.0
    %844 = vmatpush.msra.mxu0 0.0
    %845 = vmatpush.msra.mxu0 0.0
    %846 = vmatpush.msra.mxu0 %v821
    %847 = vmatpush.msra.mxu0 %v820
    %848 = vmatpush.msra.mxu0 %v819
    %849 = vmatpush.msra.mxu0 %v818
    %850 = vmatpush.msra.mxu0 %v817
    %851 = vmatpush.msra.mxu0 %v816
    %852 = vmatpush.msra.mxu0 %v815
    %853 = vmatpush.msra.mxu0 %v814
    %854 = vmatmul.f32.gmra.mxu0 %v833
    %v855 = vpop.f32.mrf.mxu0
    %v856 = vadd.f32 %v825, %v855
    %857 = vmatmul.f32.gmra.mxu0 %v836
    %v858 = vpop.f32.mrf.mxu0
    %v859 = vadd.f32 %v830, %v858
    %860 = vdwg.mxu0
    %v861 = vtanh.pop %v856
    %v862 = vmul.f32 %v861, 1.442695
    %v863 = vpow.pop %v862
    %v864 = vmul.f32 %v708, %v863
    %v865 = vadd.f32 %v864, %v859
    %v866 = vadd.f32 %v234, %v865
    %v868 = vrot.slane %v865, 2
    %v870 = vadd.f32 %v866, %v868
    %872 = vset.pattern.permute.xlu0 0
    %873 = vperm.xlu0 %872, %v178
    %v874 = vpop.permute.xlu0 %873
    %877 = vset.pattern.permute.xlu0 0
    %878 = vperm.xlu0 %877, %v179
    %v879 = vpop.permute.xlu0 %878
    %882 = vset.pattern.permute.xlu0 0
    %883 = vperm.xlu0 %882, %v180
    %v884 = vpop.permute.xlu0 %883
    %887 = vset.pattern.permute.xlu0 0
    %888 = vperm.xlu0 %887, %v181
    %v889 = vpop.permute.xlu0 %888
    %vm891 = vcmask 15360
    %v893 = vsel %vm891, %v118, 0
    %v896 = vsel %vm891, %v119, 0
    %v899 = vsel %vm891, %v120, 0
    %v902 = vsel %vm891, %v121, 0
    %vm904 = vcmask 1041408
    %v906 = vsel %vm904, %v866, 0
    %908 = vmatpush.msra.mxu0 0.0
    %909 = vmatpush.msra.mxu0 0.0
    %910 = vmatpush.msra.mxu0 0.0
    %911 = vmatpush.msra.mxu0 0.0
    %912 = vmatpush.msra.mxu0 0.0
    %913 = vmatpush.msra.mxu0 0.0
    %914 = vmatpush.msra.mxu0 0.0
    %915 = vmatpush.msra.mxu0 0.0
    %916 = vmatpush.msra.mxu0 0.0
    %917 = vmatpush.msra.mxu0 0.0
    %918 = vmatpush.msra.mxu0 0.0
    %919 = vmatpush.msra.mxu0 0.0
    %920 = vmatpush.msra.mxu0 0.0
    %921 = vmatpush.msra.mxu0 0.0
    %922 = vmatpush.msra.mxu0 0.0
    %923 = vmatpush.msra.mxu0 %v906
    %924 = vmatmul.f32.gmra.mxu0 %v893
    %v925 = vpop.f32.mrf.mxu0
    %v926 = vadd.f32 %v874, %v925
    %927 = vmatmul.f32.gmra.mxu0 %v896
    %v928 = vpop.f32.mrf.mxu0
    %v929 = vadd.f32 %v879, %v928
    %930 = vmatmul.f32.gmra.mxu0 %v899
    %v931 = vpop.f32.mrf.mxu0
    %v932 = vadd.f32 %v884, %v931
    %933 = vmatmul.f32.gmra.mxu0 %v902
    %v934 = vpop.f32.mrf.mxu0
    %v935 = vadd.f32 %v889, %v934
    %936 = vdwg.mxu0
    %v937 = vtanh.pop %v926
    %v938 = vtanh.pop %v929
    %v939 = vtanh.pop %v932
    %v940 = vtanh.pop %v935
    %942 = vset.pattern.permute.xlu0 0
    %943 = vperm.xlu0 %942, %v228
    %v944 = vpop.permute.xlu0 %943
    %vm946 = vcmask 261120
    %v948 = vsel %vm946, %v214, 0
    %950 = vmatpush.msra.mxu0 0.0
    %951 = vmatpush.msra.mxu0 0.0
    %952 = vmatpush.msra.mxu0 0.0
    %953 = vmatpush.msra.mxu0 0.0
    %954 = vmatpush.msra.mxu0 0.0
    %955 = vmatpush.msra.mxu0 0.0
    %956 = vmatpush.msra.mxu0 0.0
    %957 = vmatpush.msra.mxu0 0.0
    %958 = vmatpush.msra.mxu0 0.0
    %959 = vmatpush.msra.mxu0 0.0
    %960 = vmatpush.msra.mxu0 0.0
    %961 = vmatpush.msra.mxu0 0.0
    %962 = vmatpush.msra.mxu0 %v940
    %963 = vmatpush.msra.mxu0 %v939
    %964 = vmatpush.msra.mxu0 %v938
    %965 = vmatpush.msra.mxu0 %v937
    %966 = vmatmul.f32.gmra.mxu0 %v948
    %v967 = vpop.f32.mrf.mxu0
    %v968 = vadd.f32 %v944, %v967
    %969 = vdwg.mxu0
    %v970 = vtanh.pop %v968
    %v971 = vmul.f32 %v970, 1.442695
    %v972 = vpow.pop %v971
    %v973 = vmul.f32 %v866, %v972
    %v975 = vrot.slane %v968, 2
    %v977 = vadd.f32 %v973, %v975
    %979 = vset.pattern.permute.xlu0 0
    %980 = vperm.xlu0 %979, %v182
    %v981 = vpop.permute.xlu0 %980
    %984 = vset.pattern.permute.xlu0 0
    %985 = vperm.xlu0 %984, %v183
    %v986 = vpop.permute.xlu0 %985
    %989 = vset.pattern.permute.xlu0 0
    %990 = vperm.xlu0 %989, %v184
    %v991 = vpop.permute.xlu0 %990
    %994 = vset.pattern.permute.xlu0 0
    %995 = vperm.xlu0 %994, %v185
    %v996 = vpop.permute.xlu0 %995
    %v999 = vsel %vm891, %v122, 0
    %v1002 = vsel %vm891, %v123, 0
    %v1005 = vsel %vm891, %v124, 0
    %v1008 = vsel %vm891, %v125, 0
    %v1011 = vsel %vm904, %v977, 0
    %1013 = vmatpush.msra.mxu0 0.0
    %1014 = vmatpush.msra.mxu0 0.0
    %1015 = vmatpush.msra.mxu0 0.0
    %1016 = vmatpush.msra.mxu0 0.0
    %1017 = vmatpush.msra.mxu0 0.0
    %1018 = vmatpush.msra.mxu0 0.0
    %1019 = vmatpush.msra.mxu0 0.0
    %1020 = vmatpush.msra.mxu0 0.0
    %1021 = vmatpush.msra.mxu0 0.0
    %1022 = vmatpush.msra.mxu0 0.0
    %1023 = vmatpush.msra.mxu0 0.0
    %1024 = vmatpush.msra.mxu0 0.0
    %1025 = vmatpush.msra.mxu0 0.0
    %1026 = vmatpush.msra.mxu0 0.0
    %1027 = vmatpush.msra.mxu0 0.0
    %1028 = vmatpush.msra.mxu0 %v1011
    %1029 = vmatmul.f32.gmra.mxu0 %v999
    %v1030 = vpop.f32.mrf.mxu0
    %v1031 = vadd.f32 %v981, %v1030
    %1032 = vmatmul.f32.gmra.mxu0 %v1002
    %v1033 = vpop.f32.mrf.mxu0
    %v1034 = vadd.f32 %v986, %v1033
    %1035 = vmatmul.f32.gmra.mxu0 %v1005
    %v1036 = vpop.f32.mrf.mxu0
    %v1037 = vadd.f32 %v991, %v1036
    %1038 = vmatmul.f32.gmra.mxu0 %v1008
    %v1039 = vpop.f32.mrf.mxu0
    %v1040 = vadd.f32 %v996, %v1039
    %1041 = vdwg.mxu0
    %v1042 = vtanh.pop %v1031
    %v1043 = vtanh.pop %v1034
    %v1044 = vtanh.pop %v1037
    %v1045 = vtanh.pop %v1040
    %1047 = vset.pattern.permute.xlu0 0
    %1048 = vperm.xlu0 %1047, %v229
    %v1049 = vpop.permute.xlu0 %1048
    %v1052 = vsel %vm946, %v215, 0
    %1054 = vmatpush.msra.mxu0 0.0
    %1055 = vmatpush.msra.mxu0 0.0
    %1056 = vmatpush.msra.mxu0 0.0
    %1057 = vmatpush.msra.mxu0 0.0
    %1058 = vmatpush.msra.mxu0 0.0
    %1059 = vmatpush.msra.mxu0 0.0
    %1060 = vmatpush.msra.mxu0 0.0
    %1061 = vmatpush.msra.mxu0 0.0
    %1062 = vmatpush.msra.mxu0 0.0
    %1063 = vmatpush.msra.mxu0 0.0
    %1064 = vmatpush.msra.mxu0 0.0
    %1065 = vmatpush.msra.mxu0 0.0
    %1066 = vmatpush.msra.mxu0 %v1045
    %1067 = vmatpush.msra.mxu0 %v1044
    %1068 = vmatpush.msra.mxu0 %v1043
    %1069 = vmatpush.msra.mxu0 %v1042
    %1070 = vmatmul.f32.gmra.mxu0 %v1052
    %v1071 = vpop.f32.mrf.mxu0
    %v1072 = vadd.f32 %v1049, %v1071
    %1073 = vdwg.mxu0
    %v1074 = vtanh.pop %v1072
    %v1075 = vmul.f32 %v1074, 1.442695
    %v1076 = vpow.pop %v1075
    %v1077 = vmul.f32 %v977, %v1076
    %v1079 = vrot.slane %v1072, 2
    %v1081 = vadd.f32 %v1077, %v1079
    %v1083 = vrot.slane %v234, 2
    %v1085 = vadd.f32 %v1081, %v1083
    %v1087 = vrot.slane %v1085, 6
    %v1089 = vsel %vm904, %v870, %v1087
    %v1090 = vrot.slane %v865, 4
    %v1092 = vadd.f32 %v870, %v1090
    %v1093 = vrot.slane %v865, 6
    %v1095 = vadd.f32 %v1092, %v1093
    %1097 = vset.pattern.permute.xlu0 0
    %1098 = vperm.xlu0 %1097, %v198
    %v1099 = vpop.permute.xlu0 %1098
    %1102 = vset.pattern.permute.xlu0 0
    %1103 = vperm.xlu0 %1102, %v199
    %v1104 = vpop.permute.xlu0 %1103
    %1107 = vset.pattern.permute.xlu0 0
    %1108 = vperm.xlu0 %1107, %v200
    %v1109 = vpop.permute.xlu0 %1108
    %1112 = vset.pattern.permute.xlu0 0
    %1113 = vperm.xlu0 %1112, %v201
    %v1114 = vpop.permute.xlu0 %1113
    %v1117 = vsel %vm891, %v138, 0
    %v1120 = vsel %vm891, %v139, 0
    %v1123 = vsel %vm891, %v140, 0
    %v1126 = vsel %vm891, %v141, 0
    %v1129 = vsel %vm904, %v1092, 0
    %1131 = vmatpush.msra.mxu0 0.0
    %1132 = vmatpush.msra.mxu0 0.0
    %1133 = vmatpush.msra.mxu0 0.0
    %1134 = vmatpush.msra.mxu0 0.0
    %1135 = vmatpush.msra.mxu0 0.0
    %1136 = vmatpush.msra.mxu0 0.0
    %1137 = vmatpush.msra.mxu0 0.0
    %1138 = vmatpush.msra.mxu0 0.0
    %1139 = vmatpush.msra.mxu0 0.0
    %1140 = vmatpush.msra.mxu0 0.0
    %1141 = vmatpush.msra.mxu0 0.0
    %1142 = vmatpush.msra.mxu0 0.0
    %1143 = vmatpush.msra.mxu0 0.0
    %1144 = vmatpush.msra.mxu0 0.0
    %1145 = vmatpush.msra.mxu0 0.0
    %1146 = vmatpush.msra.mxu0 %v1129
    %1147 = vmatmul.f32.gmra.mxu0 %v1117
    %v1148 = vpop.f32.mrf.mxu0
    %v1149 = vadd.f32 %v1099, %v1148
    %1150 = vmatmul.f32.gmra.mxu0 %v1120
    %v1151 = vpop.f32.mrf.mxu0
    %v1152 = vadd.f32 %v1104, %v1151
    %1153 = vmatmul.f32.gmra.mxu0 %v1123
    %v1154 = vpop.f32.mrf.mxu0
    %v1155 = vadd.f32 %v1109, %v1154
    %1156 = vmatmul.f32.gmra.mxu0 %v1126
    %v1157 = vpop.f32.mrf.mxu0
    %v1158 = vadd.f32 %v1114, %v1157
    %1159 = vdwg.mxu0
    %v1160 = vtanh.pop %v1149
    %v1161 = vtanh.pop %v1152
    %v1162 = vtanh.pop %v1155
    %v1163 = vtanh.pop %v1158
    %1165 = vset.pattern.permute.xlu0 0
    %1166 = vperm.xlu0 %1165, %v232
    %v1167 = vpop.permute.xlu0 %1166
    %v1170 = vsel %vm946, %v218, 0
    %1172 = vmatpush.msra.mxu0 0.0
    %1173 = vmatpush.msra.mxu0 0.0
    %1174 = vmatpush.msra.mxu0 0.0
    %1175 = vmatpush.msra.mxu0 0.0
    %1176 = vmatpush.msra.mxu0 0.0
    %1177 = vmatpush.msra.mxu0 0.0
    %1178 = vmatpush.msra.mxu0 0.0
    %1179 = vmatpush.msra.mxu0 0.0
    %1180 = vmatpush.msra.mxu0 0.0
    %1181 = vmatpush.msra.mxu0 0.0
    %1182 = vmatpush.msra.mxu0 0.0
    %1183 = vmatpush.msra.mxu0 0.0
    %1184 = vmatpush.msra.mxu0 %v1163
    %1185 = vmatpush.msra.mxu0 %v1162
    %1186 = vmatpush.msra.mxu0 %v1161
    %1187 = vmatpush.msra.mxu0 %v1160
    %1188 = vmatmul.f32.gmra.mxu0 %v1170
    %v1189 = vpop.f32.mrf.mxu0
    %v1190 = vadd.f32 %v1167, %v1189
    %1191 = vdwg.mxu0
    %v1192 = vtanh.pop %v1190
    %v1193 = vmul.f32 %v1192, 1.442695
    %v1194 = vpow.pop %v1193
    %v1195 = vmul.f32 %v1092, %v1194
    %v1197 = vrot.slane %v1190, 2
    %v1199 = vadd.f32 %v1195, %v1197
    %1201 = vset.pattern.permute.xlu0 0
    %1202 = vperm.xlu0 %1201, %v202
    %v1203 = vpop.permute.xlu0 %1202
    %1206 = vset.pattern.permute.xlu0 0
    %1207 = vperm.xlu0 %1206, %v203
    %v1208 = vpop.permute.xlu0 %1207
    %1211 = vset.pattern.permute.xlu0 0
    %1212 = vperm.xlu0 %1211, %v204
    %v1213 = vpop.permute.xlu0 %1212
    %1216 = vset.pattern.permute.xlu0 0
    %1217 = vperm.xlu0 %1216, %v205
    %v1218 = vpop.permute.xlu0 %1217
    %v1221 = vsel %vm891, %v142, 0
    %v1224 = vsel %vm891, %v143, 0
    %v1227 = vsel %vm891, %v144, 0
    %v1230 = vsel %vm891, %v145, 0
    %v1233 = vsel %vm904, %v1199, 0
    %1235 = vmatpush.msra.mxu0 0.0
    %1236 = vmatpush.msra.mxu0 0.0
    %1237 = vmatpush.msra.mxu0 0.0
    %1238 = vmatpush.msra.mxu0 0.0
    %1239 = vmatpush.msra.mxu0 0.0
    %1240 = vmatpush.msra.mxu0 0.0
    %1241 = vmatpush.msra.mxu0 0.0
    %1242 = vmatpush.msra.mxu0 0.0
    %1243 = vmatpush.msra.mxu0 0.0
    %1244 = vmatpush.msra.mxu0 0.0
    %1245 = vmatpush.msra.mxu0 0.0
    %1246 = vmatpush.msra.mxu0 0.0
    %1247 = vmatpush.msra.mxu0 0.0
    %1248 = vmatpush.msra.mxu0 0.0
    %1249 = vmatpush.msra.mxu0 0.0
    %1250 = vmatpush.msra.mxu0 %v1233
    %1251 = vmatmul.f32.gmra.mxu0 %v1221
    %v1252 = vpop.f32.mrf.mxu0
    %v1253 = vadd.f32 %v1203, %v1252
    %1254 = vmatmul.f32.gmra.mxu0 %v1224
    %v1255 = vpop.f32.mrf.mxu0
    %v1256 = vadd.f32 %v1208, %v1255
    %1257 = vmatmul.f32.gmra.mxu0 %v1227
    %v1258 = vpop.f32.mrf.mxu0
    %v1259 = vadd.f32 %v1213, %v1258
    %1260 = vmatmul.f32.gmra.mxu0 %v1230
    %v1261 = vpop.f32.mrf.mxu0
    %v1262 = vadd.f32 %v1218, %v1261
    %1263 = vdwg.mxu0
    %v1264 = vtanh.pop %v1253
    %v1265 = vtanh.pop %v1256
    %v1266 = vtanh.pop %v1259
    %v1267 = vtanh.pop %v1262
    %1269 = vset.pattern.permute.xlu0 0
    %1270 = vperm.xlu0 %1269, %v233
    %v1271 = vpop.permute.xlu0 %1270
    %v1274 = vsel %vm946, %v219, 0
    %1276 = vmatpush.msra.mxu0 0.0
    %1277 = vmatpush.msra.mxu0 0.0
    %1278 = vmatpush.msra.mxu0 0.0
    %1279 = vmatpush.msra.mxu0 0.0
    %1280 = vmatpush.msra.mxu0 0.0
    %1281 = vmatpush.msra.mxu0 0.0
    %1282 = vmatpush.msra.mxu0 0.0
    %1283 = vmatpush.msra.mxu0 0.0
    %1284 = vmatpush.msra.mxu0 0.0
    %1285 = vmatpush.msra.mxu0 0.0
    %1286 = vmatpush.msra.mxu0 0.0
    %1287 = vmatpush.msra.mxu0 0.0
    %1288 = vmatpush.msra.mxu0 %v1267
    %1289 = vmatpush.msra.mxu0 %v1266
    %1290 = vmatpush.msra.mxu0 %v1265
    %1291 = vmatpush.msra.mxu0 %v1264
    %1292 = vmatmul.f32.gmra.mxu0 %v1274
    %v1293 = vpop.f32.mrf.mxu0
    %v1294 = vadd.f32 %v1271, %v1293
    %1295 = vdwg.mxu0
    %v1296 = vtanh.pop %v1294
    %v1297 = vmul.f32 %v1296, 1.442695
    %v1298 = vpow.pop %v1297
    %v1299 = vmul.f32 %v1199, %v1298
    %v1301 = vrot.slane %v1294, 2
    %v1303 = vadd.f32 %v1299, %v1301
    %v1304 = vadd.f32 %v1303, %v1085
    %1306 = vset.pattern.permute.xlu0 0
    %1307 = vperm.xlu0 %1306, %v186
    %v1308 = vpop.permute.xlu0 %1307
    %1311 = vset.pattern.permute.xlu0 0
    %1312 = vperm.xlu0 %1311, %v187
    %v1313 = vpop.permute.xlu0 %1312
    %1316 = vset.pattern.permute.xlu0 0
    %1317 = vperm.xlu0 %1316, %v188
    %v1318 = vpop.permute.xlu0 %1317
    %1321 = vset.pattern.permute.xlu0 0
    %1322 = vperm.xlu0 %1321, %v189
    %v1323 = vpop.permute.xlu0 %1322
    %1326 = vset.pattern.permute.xlu0 0
    %1327 = vperm.xlu0 %1326, %v190
    %v1328 = vpop.permute.xlu0 %1327
    %1331 = vset.pattern.permute.xlu0 0
    %1332 = vperm.xlu0 %1331, %v191
    %v1333 = vpop.permute.xlu0 %1332
    %vm1335 = vcmask 31744
    %v1337 = vsel %vm1335, %v126, 0
    %v1340 = vsel %vm1335, %v127, 0
    %v1343 = vsel %vm1335, %v128, 0
    %v1346 = vsel %vm1335, %v129, 0
    %v1349 = vsel %vm1335, %v130, 0
    %v1352 = vsel %vm1335, %v131, 0
    %vm1354 = vcmask 1043456
    %v1356 = vsel %vm1354, %v1089, 0
    %1358 = vmatpush.msra.mxu0 0.0
    %1359 = vmatpush.msra.mxu0 0.0
    %1360 = vmatpush.msra.mxu0 0.0
    %1361 = vmatpush.msra.mxu0 0.0
    %1362 = vmatpush.msra.mxu0 0.0
    %1363 = vmatpush.msra.mxu0 0.0
    %1364 = vmatpush.msra.mxu0 0.0
    %1365 = vmatpush.msra.mxu0 0.0
    %1366 = vmatpush.msra.mxu0 0.0
    %1367 = vmatpush.msra.mxu0 0.0
    %1368 = vmatpush.msra.mxu0 0.0
    %1369 = vmatpush.msra.mxu0 0.0
    %1370 = vmatpush.msra.mxu0 0.0
    %1371 = vmatpush.msra.mxu0 0.0
    %1372 = vmatpush.msra.mxu0 0.0
    %1373 = vmatpush.msra.mxu0 %v1356
    %1374 = vmatmul.f32.gmra.mxu0 %v1337
    %v1375 = vpop.f32.mrf.mxu0
    %v1376 = vadd.f32 %v1308, %v1375
    %1377 = vmatmul.f32.gmra.mxu0 %v1340
    %v1378 = vpop.f32.mrf.mxu0
    %v1379 = vadd.f32 %v1313, %v1378
    %1380 = vmatmul.f32.gmra.mxu0 %v1343
    %v1381 = vpop.f32.mrf.mxu0
    %v1382 = vadd.f32 %v1318, %v1381
    %1383 = vmatmul.f32.gmra.mxu0 %v1346
    %v1384 = vpop.f32.mrf.mxu0
    %v1385 = vadd.f32 %v1323, %v1384
    %1386 = vmatmul.f32.gmra.mxu0 %v1349
    %v1387 = vpop.f32.mrf.mxu0
    %v1388 = vadd.f32 %v1328, %v1387
    %1389 = vmatmul.f32.gmra.mxu0 %v1352
    %v1390 = vpop.f32.mrf.mxu0
    %v1391 = vadd.f32 %v1333, %v1390
    %1392 = vdwg.mxu0
    %v1393 = vtanh.pop %v1376
    %v1394 = vtanh.pop %v1379
    %v1395 = vtanh.pop %v1382
    %v1396 = vtanh.pop %v1385
    %v1397 = vtanh.pop %v1388
    %v1398 = vtanh.pop %v1391
    %1400 = vset.pattern.permute.xlu0 0
    %1401 = vperm.xlu0 %1400, %v230
    %v1402 = vpop.permute.xlu0 %1401
    %vm1404 = vcmask 392192
    %v1406 = vsel %vm1404, %v216, 0
    %1408 = vmatpush.msra.mxu0 0.0
    %1409 = vmatpush.msra.mxu0 0.0
    %1410 = vmatpush.msra.mxu0 0.0
    %1411 = vmatpush.msra.mxu0 0.0
    %1412 = vmatpush.msra.mxu0 0.0
    %1413 = vmatpush.msra.mxu0 0.0
    %1414 = vmatpush.msra.mxu0 0.0
    %1415 = vmatpush.msra.mxu0 0.0
    %1416 = vmatpush.msra.mxu0 0.0
    %1417 = vmatpush.msra.mxu0 0.0
    %1418 = vmatpush.msra.mxu0 %v1398
    %1419 = vmatpush.msra.mxu0 %v1397
    %1420 = vmatpush.msra.mxu0 %v1396
    %1421 = vmatpush.msra.mxu0 %v1395
    %1422 = vmatpush.msra.mxu0 %v1394
    %1423 = vmatpush.msra.mxu0 %v1393
    %1424 = vmatmul.f32.gmra.mxu0 %v1406
    %v1425 = vpop.f32.mrf.mxu0
    %v1426 = vadd.f32 %v1402, %v1425
    %1427 = vdwg.mxu0
    %v1428 = vtanh.pop %v1426
    %v1429 = vmul.f32 %v1428, 1.442695
    %v1430 = vpow.pop %v1429
    %v1431 = vmul.f32 %v1089, %v1430
    %v1433 = vrot.slane %v1426, 4
    %v1435 = vadd.f32 %v1431, %v1433
    %1437 = vset.pattern.permute.xlu0 0
    %1438 = vperm.xlu0 %1437, %v192
    %v1439 = vpop.permute.xlu0 %1438
    %1442 = vset.pattern.permute.xlu0 0
    %1443 = vperm.xlu0 %1442, %v193
    %v1444 = vpop.permute.xlu0 %1443
    %1447 = vset.pattern.permute.xlu0 0
    %1448 = vperm.xlu0 %1447, %v194
    %v1449 = vpop.permute.xlu0 %1448
    %1452 = vset.pattern.permute.xlu0 0
    %1453 = vperm.xlu0 %1452, %v195
    %v1454 = vpop.permute.xlu0 %1453
    %1457 = vset.pattern.permute.xlu0 0
    %1458 = vperm.xlu0 %1457, %v196
    %v1459 = vpop.permute.xlu0 %1458
    %1462 = vset.pattern.permute.xlu0 0
    %1463 = vperm.xlu0 %1462, %v197
    %v1464 = vpop.permute.xlu0 %1463
    %v1467 = vsel %vm1335, %v132, 0
    %v1470 = vsel %vm1335, %v133, 0
    %v1473 = vsel %vm1335, %v134, 0
    %v1476 = vsel %vm1335, %v135, 0
    %v1479 = vsel %vm1335, %v136, 0
    %v1482 = vsel %vm1335, %v137, 0
    %v1485 = vsel %vm1354, %v1435, 0
    %1487 = vmatpush.msra.mxu0 0.0
    %1488 = vmatpush.msra.mxu0 0.0
    %1489 = vmatpush.msra.mxu0 0.0
    %1490 = vmatpush.msra.mxu0 0.0
    %1491 = vmatpush.msra.mxu0 0.0
    %1492 = vmatpush.msra.mxu0 0.0
    %1493 = vmatpush.msra.mxu0 0.0
    %1494 = vmatpush.msra.mxu0 0.0
    %1495 = vmatpush.msra.mxu0 0.0
    %1496 = vmatpush.msra.mxu0 0.0
    %1497 = vmatpush.msra.mxu0 0.0
    %1498 = vmatpush.msra.mxu0 0.0
    %1499 = vmatpush.msra.mxu0 0.0
    %1500 = vmatpush.msra.mxu0 0.0
    %1501 = vmatpush.msra.mxu0 0.0
    %1502 = vmatpush.msra.mxu0 %v1485
    %1503 = vmatmul.f32.gmra.mxu0 %v1467
    %v1504 = vpop.f32.mrf.mxu0
    %v1505 = vadd.f32 %v1439, %v1504
    %1506 = vmatmul.f32.gmra.mxu0 %v1470
    %v1507 = vpop.f32.mrf.mxu0
    %v1508 = vadd.f32 %v1444, %v1507
    %1509 = vmatmul.f32.gmra.mxu0 %v1473
    %v1510 = vpop.f32.mrf.mxu0
    %v1511 = vadd.f32 %v1449, %v1510
    %1512 = vmatmul.f32.gmra.mxu0 %v1476
    %v1513 = vpop.f32.mrf.mxu0
    %v1514 = vadd.f32 %v1454, %v1513
    %1515 = vmatmul.f32.gmra.mxu0 %v1479
    %v1516 = vpop.f32.mrf.mxu0
    %v1517 = vadd.f32 %v1459, %v1516
    %1518 = vmatmul.f32.gmra.mxu0 %v1482
    %v1519 = vpop.f32.mrf.mxu0
    %v1520 = vadd.f32 %v1464, %v1519
    %1521 = vdwg.mxu0
    %v1522 = vtanh.pop %v1505
    %v1523 = vtanh.pop %v1508
    %v1524 = vtanh.pop %v1511
    %v1525 = vtanh.pop %v1514
    %v1526 = vtanh.pop %v1517
    %v1527 = vtanh.pop %v1520
    %1529 = vset.pattern.permute.xlu0 0
    %1530 = vperm.xlu0 %1529, %v231
    %v1531 = vpop.permute.xlu0 %1530
    %v1534 = vsel %vm1404, %v217, 0
    %1536 = vmatpush.msra.mxu0 0.0
    %1537 = vmatpush.msra.mxu0 0.0
    %1538 = vmatpush.msra.mxu0 0.0
    %1539 = vmatpush.msra.mxu0 0.0
    %1540 = vmatpush.msra.mxu0 0.0
    %1541 = vmatpush.msra.mxu0 0.0
    %1542 = vmatpush.msra.mxu0 0.0
    %1543 = vmatpush.msra.mxu0 0.0
    %1544 = vmatpush.msra.mxu0 0.0
    %1545 = vmatpush.msra.mxu0 0.0
    %1546 = vmatpush.msra.mxu0 %v1527
    %1547 = vmatpush.msra.mxu0 %v1526
    %1548 = vmatpush.msra.mxu0 %v1525
    %1549 = vmatpush.msra.mxu0 %v1524
    %1550 = vmatpush.msra.mxu0 %v1523
    %1551 = vmatpush.msra.mxu0 %v1522
    %1552 = vmatmul.f32.gmra.mxu0 %v1534
    %v1553 = vpop.f32.mrf.mxu0
    %v1554 = vadd.f32 %v1531, %v1553
    %1555 = vdwg.mxu0
    %v1556 = vtanh.pop %v1554
    %v1557 = vmul.f32 %v1556, 1.442695
    %v1558 = vpow.pop %v1557
    %v1559 = vmul.f32 %v1435, %v1558
    %v1561 = vrot.slane %v1554, 4
    %v1563 = vadd.f32 %v1559, %v1561
    %v1564 = vrot.slane %v234, 4
    %v1566 = vadd.f32 %v1563, %v1564
    %v1568 = vrot.slane %v1304, 6
    %v1571 = vrot.slane %v1566, 4
    %v1573 = vsel %vm904, %v1095, %v1568
    %v1574 = vsel %vm1354, %v1573, %v1571
    %1575 = vst [vmem:[%s6] sm:$0xff] %v1574
    // Predicated region
    $region42: #{forward.1} parent=1 // pred_check
      _
    $region43: #{forward.1} parent=1 // pred_check_branch
      %1577 = sbr.rel (0) target = $region45
    $region44: #{forward.1} parent=1 // pred_region
      _
    $region45: #{forward.1} parent=1 // pred_fallthru
      _
    // Predicated region
    $region46: #{forward.1} parent=1 // pred_check
      _
    $region47: #{forward.1} parent=1 // pred_check_branch
      %1579 = sbr.rel (0) target = $region49
    $region48: #{forward.1} parent=1 // pred_region
      _
    $region49: #{forward.1} parent=1 // pred_fallthru
      _
    %1580 = vsyncpa [#allocation3], 1
    %1581 = vsyncpa [#allocation5], 1
    %1582 = vsyncpa [#allocation8], 1

</llo_original>
